<compile_context>
chip_gen: v7x
topology: tpu7x:2x2x1
jax: 0.10.0
libtpu: 0.0.40
codegen_flags: <defaults>
</compile_context>

<pallas_src>
import jax
import jax.numpy as jnp
from jax.experimental import pallas as pl
from jax.experimental.pallas import tpu as pltpu


# --------------------------------------------------------------------------- #
# Kernel
# --------------------------------------------------------------------------- #
def _half_layernorm(x, g, b, left, h_dim, eps=1e-5):
    """LayerNorm applied independently to each half of the lane axis.

    The two MLP branches are fused along the feature axis, so the per-branch
    LayerNorm(H) becomes a LayerNorm over lanes [0, H) and [H, 2H) separately.
    Right-half statistics are derived as (total - left), so only one masked
    copy of x and of d*d is materialized, and rsqrt runs on the narrow
    (rows, 1) per-half variances instead of the broadcast (rows, 2H) tensor."""
    inv_h = 1.0 / h_dim
    s_all = jnp.sum(x, axis=-1, keepdims=True)
    s_l = jnp.sum(jnp.where(left, x, 0.0), axis=-1, keepdims=True)
    mu = jnp.where(left, s_l * inv_h, (s_all - s_l) * inv_h)
    d = x - mu
    d2 = d * d
    v_all = jnp.sum(d2, axis=-1, keepdims=True)
    v_l = jnp.sum(jnp.where(left, d2, 0.0), axis=-1, keepdims=True)
    inv_std = jnp.where(left,
                        jax.lax.rsqrt(v_l * inv_h + eps),
                        jax.lax.rsqrt((v_all - v_l) * inv_h + eps))
    return d * inv_std * g + b


def target_pred_kernel(feat_ref, cand_ref, w1f_ref, w2_ref, wom_ref, vec_ref,
                       prob_ref, off_ref):
    rows = cand_ref.shape[0]            # bb * N flattened rows in this block
    two_h = w1f_ref.shape[1]            # 2 * hidden_dim (both branches fused)
    h_dim = two_h // 2
    bb, n_cand = prob_ref.shape

    vecs = vec_ref[...]                 # (10, 2H) f32 packed small parameters
    w1c_x, w1c_y = vecs[0:1], vecs[1:2]
    b1, g1, be1 = vecs[2:3], vecs[3:4], vecs[4:5]
    b2, g2, be2 = vecs[5:6], vecs[6:7], vecs[7:8]
    wo_p = vecs[8:9]                    # prob output weight (zeros in right half)
    pbo = vecs[9:10, 0:1]               # (1, 1) prob output bias
    mbo = vecs[9:10, 1:3]               # (1, 2) offset output bias

    left = jax.lax.broadcasted_iota(jnp.int32, (rows, two_h), 1) < h_dim

    # First Linear, feat part: a single (bb, C) x (C, 2H) bf16 MXU pass on the
    # un-repeated features, then a sublane broadcast across the N candidates.
    hf = jnp.dot(feat_ref[...], w1f_ref[...],
                 preferred_element_type=jnp.float32)                    # (bb, 2H)
    hf = jnp.broadcast_to(hf[:, None, :], (bb, n_cand, two_h))
    hf = hf.reshape(rows, two_h)

    # First Linear, candidate (x, y) part: K=2 contraction as VPU broadcast FMAs
    # (kept in f32) instead of wasting an MXU pass on K=2.
    cand = cand_ref[...]                                                # (rows, 2)
    h = hf + cand[:, 0:1] * w1c_x + cand[:, 1:2] * w1c_y + b1
    h = jnp.maximum(_half_layernorm(h, g1, be1, left, h_dim), 0.0)

    # Fused second Linear: block-diagonal (2H, 2H) weight keeps branches apart.
    h = jnp.dot(h.astype(jnp.bfloat16), w2_ref[...],
                preferred_element_type=jnp.float32) + b2
    h = jnp.maximum(_half_layernorm(h, g2, be2, left, h_dim), 0.0)
    h_bf = h.astype(jnp.bfloat16)       # cast once, reused by both output heads

    # prob head: 1-wide contraction on the VPU/XLU (mul + lane reduce) giving
    # lane-dense (bb, N) logits, so softmax max/sum are lane reductions and the
    # prob store is lane-dense.  Denominator reciprocal goes to the EUP slot.
    h3 = jnp.reshape(h, (bb, n_cand, two_h))
    logits = jnp.sum(h3 * wo_p[None], axis=-1) + pbo                    # (bb, N)
    mmax = jnp.max(logits, axis=-1, keepdims=True)
    e = jnp.exp(logits - mmax)
    inv_sum = pl.reciprocal(jnp.sum(e, axis=-1, keepdims=True), approx=True)
    prob_ref[...] = e * inv_sum

    # mean head: (2H, 2) MXU pass (top half zero); block spans the full last dim
    # of the HBM output so writeback is tight.
    off_ref[...] = jnp.dot(h_bf, wom_ref[...],
                           preferred_element_type=jnp.float32) + mbo    # (rows, 2)


# --------------------------------------------------------------------------- #
# Wrapper
# --------------------------------------------------------------------------- #
def _num_tensorcores():
    """2 TensorCores per chip on v7x-class parts, else 1 (v5e / v6e)."""
    try:
        kind = jax.devices()[0].device_kind.lower()
    except Exception:
        return 1
    return 2 if ("v7" in kind or "7x" in kind) else 1


def _pick_block_batch(batch, n_cand, n_cores=1, max_rows=1024):
    """Largest divisor bb of `batch` with bb * n_cand <= max_rows rows per grid
    step (amortizes per-step overhead, fills the MXU M dimension), preferring
    choices whose grid (batch // bb) splits evenly across the TensorCores."""
    divisors = [d for d in range(1, batch + 1)
                if batch % d == 0 and d * n_cand <= max_rows]
    if not divisors:
        return 1
    core_ok = [d for d in divisors if (batch // d) % n_cores == 0]
    return max(core_ok) if core_ok else max(divisors)


def target_pred_forward(feat_in, tar_candidate, packed_params):
    """feat_in: (B, 1, C) f32, tar_candidate: (B, N, 2) f32.
    Returns (tar_candit_prob (B, N), tar_offset_mean (B, N, 2))."""
    w1f, w2, wo_m, vecs = packed_params
    batch, _, in_ch = feat_in.shape
    _, n_cand, _ = tar_candidate.shape
    bb = _pick_block_batch(batch, n_cand, _num_tensorcores())
    grid_b = batch // bb                 # each block holds bb FULL candidate sets,
    rows = bb * n_cand                   # so the in-kernel softmax stays valid

    # Layout plumbing (outside the kernel): bf16 features WITHOUT the N-fold
    # repeat, and pre-blocked 3-D arrays so every BlockSpec squeezes the leading
    # grid dim and keeps full trailing dims (no (8,128) divisibility issues).
    feat_b = feat_in[:, 0, :].astype(jnp.bfloat16).reshape(grid_b, bb, in_ch)
    cand_b = tar_candidate.reshape(grid_b, rows, 2)

    in_specs = [
        pl.BlockSpec((None, bb, in_ch), lambda g: (g, 0, 0)),
        pl.BlockSpec((None, rows, 2), lambda g: (g, 0, 0)),
        pl.BlockSpec(w1f.shape, lambda g: (0, 0)),     # grid-invariant weights:
        pl.BlockSpec(w2.shape, lambda g: (0, 0)),      # constant index map, so the
        pl.BlockSpec(wo_m.shape, lambda g: (0, 0)),    # pipeline does not re-DMA
        pl.BlockSpec(vecs.shape, lambda g: (0, 0)),    # them across grid steps
    ]
    out_shape = (
        jax.ShapeDtypeStruct((grid_b, bb, n_cand), jnp.float32),   # prob (lane-dense)
        jax.ShapeDtypeStruct((grid_b, rows, 2), jnp.float32),      # offsets
    )
    out_specs = (
        pl.BlockSpec((None, bb, n_cand), lambda g: (g, 0, 0)),
        pl.BlockSpec((None, rows, 2), lambda g: (g, 0, 0)),
    )

    prob, off = pl.pallas_call(
        target_pred_kernel,
        out_shape=out_shape,
        grid_spec=pltpu.PrefetchScalarGridSpec(
            num_scalar_prefetch=0,
            grid=(grid_b,),
            in_specs=in_specs,
            out_specs=out_specs,
        ),
        compiler_params=pltpu.CompilerParams(
            dimension_semantics=("parallel",)),
    )(feat_b, cand_b, w1f, w2, wo_m, vecs)

    return prob.reshape(batch, n_cand), off.reshape(batch, n_cand, 2)


# --------------------------------------------------------------------------- #
# Parameters
# --------------------------------------------------------------------------- #
def make_params(key, in_channels, hidden_dim, feat_num=2):
    """Per-branch (unfused) parameters, PyTorch-module style."""
    keys = iter(jax.random.split(key, 20))

    def lin(fan_in, fan_out):
        # Keep test weights exactly bf16-representable so the pure-f32
        # reference comparison stays tight despite bf16 MXU matmuls.
        w = jax.random.normal(next(keys), (fan_in, fan_out), jnp.float32) * 0.1
        return w.astype(jnp.bfloat16).astype(jnp.float32)

    def vec(n, base=0.0):
        return base + 0.1 * jax.random.normal(next(keys), (n,), jnp.float32)

    def branch(out_dim):
        return dict(
            W1=lin(in_channels + 2, hidden_dim),
            b1=vec(hidden_dim), g1=vec(hidden_dim, 1.0), be1=vec(hidden_dim),
            W2=lin(hidden_dim, hidden_dim),
            b2=vec(hidden_dim), g2=vec(hidden_dim, 1.0), be2=vec(hidden_dim),
            Wo=lin(hidden_dim, out_dim),
            bo=vec(out_dim),
        )

    return branch(1), branch(feat_num)          # prob_mlp, mean_mlp


def pack_params(p, m, in_channels, hidden_dim):
    """Pack the 22 per-branch tensors into 4 kernel blocks (3 bf16 + 1 f32)."""
    c, h = in_channels, hidden_dim
    two_h = 2 * h

    w1 = jnp.concatenate([p["W1"], m["W1"]], axis=1)               # (C+2, 2H)
    w1f = w1[:c].astype(jnp.bfloat16)                              # MXU part
    w1c = w1[c:]                                                   # K=2 VPU part (f32)

    w2 = jnp.zeros((two_h, two_h), jnp.float32)
    w2 = w2.at[:h, :h].set(p["W2"]).at[h:, h:].set(m["W2"])
    w2 = w2.astype(jnp.bfloat16)                                   # block-diagonal

    wo_m = jnp.zeros((two_h, 2), jnp.float32).at[h:, :].set(m["Wo"])
    wo_m = wo_m.astype(jnp.bfloat16)

    wo_p = jnp.concatenate([p["Wo"][:, 0], jnp.zeros((h,), jnp.float32)])
    bo = jnp.zeros((two_h,), jnp.float32)
    bo = bo.at[0].set(p["bo"][0]).at[1].set(m["bo"][0]).at[2].set(m["bo"][1])

    def cat(a, b):
        return jnp.concatenate([a, b])

    vecs = jnp.stack([
        w1c[0], w1c[1],
        cat(p["b1"], m["b1"]), cat(p["g1"], m["g1"]), cat(p["be1"], m["be1"]),
        cat(p["b2"], m["b2"]), cat(p["g2"], m["g2"]), cat(p["be2"], m["be2"]),
        wo_p, bo,
    ]).astype(jnp.float32)                                         # (10, 2H)

    return w1f, w2, wo_m, vecs


# --------------------------------------------------------------------------- #
# Pure-JAX reference (PyTorch-spec, f32)
# --------------------------------------------------------------------------- #
def _layernorm(x, g, b, eps=1e-5):
    mu = jnp.mean(x, axis=-1, keepdims=True)
    var = jnp.mean((x - mu) ** 2, axis=-1, keepdims=True)
    return (x - mu) * jax.lax.rsqrt(var + eps) * g + b


def ref_forward(feat_in, tar_candidate, p, m):
    n_cand = tar_candidate.shape[1]
    x = jnp.concatenate([jnp.repeat(feat_in, n_cand, axis=1), tar_candidate], axis=-1)

    def mlp(d):
        h = x @ d["W1"] + d["b1"]
        h = jnp.maximum(_layernorm(h, d["g1"], d["be1"]), 0.0)
        h = h @ d["W2"] + d["b2"]
        h = jnp.maximum(_layernorm(h, d["g2"], d["be2"]), 0.0)
        return h @ d["Wo"] + d["bo"]

    prob = jax.nn.softmax(mlp(p)[:, :, 0], axis=-1)    # squeeze(2) + softmax(dim=-1)
    return prob, mlp(m)


# --------------------------------------------------------------------------- #
if __name__ == "__main__":
    B, C, H, N = 2, 32, 64, 64     # batch, in_channels, hidden_dim, num candidates
    key = jax.random.PRNGKey(0)
    k_feat, k_cand, k_par = jax.random.split(key, 3)

    def bf16_round(x):
        return x.astype(jnp.bfloat16).astype(jnp.float32)

    feat_in = bf16_round(jax.random.normal(k_feat, (B, 1, C), jnp.float32))
    tar_candidate = bf16_round(jax.random.normal(k_cand, (B, N, 2), jnp.float32))

    p_prob, p_mean = make_params(k_par, C, H, feat_num=2)
    packed = pack_params(p_prob, p_mean, C, H)

    prob, offset = jax.jit(target_pred_forward)(feat_in, tar_candidate, packed)
    jax.block_until_ready((prob, offset))

    prob_ref, off_ref = ref_forward(feat_in, tar_candidate, p_prob, p_mean)

    assert prob.shape == (B, N) and offset.shape == (B, N, 2)
    # bf16 MXU matmuls (f32 accumulation) vs the pure-f32 reference.
    assert jnp.allclose(prob, prob_ref, atol=1e-2, rtol=5e-2)
    assert jnp.allclose(offset, off_ref, atol=5e-2, rtol=5e-2)
    # approx=True reciprocal in the softmax denominator loosens the sum-to-1 check.
    assert jnp.allclose(jnp.sum(prob, axis=-1), 1.0, atol=1e-2)

    print("KERNEL_OK")
</pallas_src>

<mosaic_0001>
module attributes {stable_mosaic.version = 11 : i64} {
  func.func @target_pred_kernel(%arg0: i32, %arg1: memref<1x2x32xbf16, #tpu.memory_space<vmem>>, %arg2: memref<1x128x2xf32, #tpu.memory_space<vmem>>, %arg3: memref<32x128xbf16, #tpu.memory_space<vmem>>, %arg4: memref<128x128xbf16, #tpu.memory_space<vmem>>, %arg5: memref<128x2xbf16, #tpu.memory_space<vmem>>, %arg6: memref<10x128xf32, #tpu.memory_space<vmem>>, %arg7: memref<1x2x64xf32, #tpu.memory_space<vmem>>, %arg8: memref<1x128x2xf32, #tpu.memory_space<vmem>>) attributes {dimension_semantics = [#tpu.dimension_semantics<parallel>], iteration_bounds = array<i64: 1>, scalar_prefetch = 0 : i64, scratch_operands = 0 : i64, tpu.core_type = #tpu.core_type<tc>, window_params = [{transform_indices = @transform_0, window_bounds = array<i64: 1, 2, 32>}, {transform_indices = @transform_1, window_bounds = array<i64: 1, 128, 2>}, {pipeline_mode = #tpu.pipeline_mode<synchronous>, transform_indices = @transform_2, window_bounds = array<i64: 32, 128>}, {pipeline_mode = #tpu.pipeline_mode<synchronous>, transform_indices = @transform_3, window_bounds = array<i64: 128, 128>}, {pipeline_mode = #tpu.pipeline_mode<synchronous>, transform_indices = @transform_4, window_bounds = array<i64: 128, 2>}, {pipeline_mode = #tpu.pipeline_mode<synchronous>, transform_indices = @transform_5, window_bounds = array<i64: 10, 128>}, {transform_indices = @transform_6, window_bounds = array<i64: 1, 2, 64>}, {transform_indices = @transform_7, window_bounds = array<i64: 1, 128, 2>}]} {
    %c0 = arith.constant 0 : index
    %c0_0 = arith.constant 0 : index
    %0 = vector.load %arg6[%c0, %c0_0] : memref<10x128xf32, #tpu.memory_space<vmem>>, vector<10x128xf32>
    %1 = vector.extract_strided_slice %0 {offsets = [0, 0], sizes = [1, 128], strides = [1, 1]} : vector<10x128xf32> to vector<1x128xf32>
    %2 = vector.extract_strided_slice %0 {offsets = [1, 0], sizes = [1, 128], strides = [1, 1]} : vector<10x128xf32> to vector<1x128xf32>
    %3 = vector.extract_strided_slice %0 {offsets = [2, 0], sizes = [1, 128], strides = [1, 1]} : vector<10x128xf32> to vector<1x128xf32>
    %4 = vector.extract_strided_slice %0 {offsets = [3, 0], sizes = [1, 128], strides = [1, 1]} : vector<10x128xf32> to vector<1x128xf32>
    %5 = vector.extract_strided_slice %0 {offsets = [4, 0], sizes = [1, 128], strides = [1, 1]} : vector<10x128xf32> to vector<1x128xf32>
    %6 = vector.extract_strided_slice %0 {offsets = [5, 0], sizes = [1, 128], strides = [1, 1]} : vector<10x128xf32> to vector<1x128xf32>
    %7 = vector.extract_strided_slice %0 {offsets = [6, 0], sizes = [1, 128], strides = [1, 1]} : vector<10x128xf32> to vector<1x128xf32>
    %8 = vector.extract_strided_slice %0 {offsets = [7, 0], sizes = [1, 128], strides = [1, 1]} : vector<10x128xf32> to vector<1x128xf32>
    %9 = vector.extract_strided_slice %0 {offsets = [8, 0], sizes = [1, 128], strides = [1, 1]} : vector<10x128xf32> to vector<1x128xf32>
    %10 = vector.extract_strided_slice %0 {offsets = [9, 0], sizes = [1, 1], strides = [1, 1]} : vector<10x128xf32> to vector<1x1xf32>
    %11 = vector.extract_strided_slice %0 {offsets = [9, 1], sizes = [1, 2], strides = [1, 1]} : vector<10x128xf32> to vector<1x2xf32>
    %12 = tpu.iota {dimensions = array<i32: 1>} : vector<128x128xi32>
    %c64_i32 = arith.constant 64 : i32
    %13 = vector.broadcast %c64_i32 : i32 to vector<128x128xi32>
    %14 = arith.cmpi slt, %12, %13 : vector<128x128xi32>
    %c0_1 = arith.constant 0 : index
    %c0_2 = arith.constant 0 : index
    %c0_3 = arith.constant 0 : index
    %15 = vector.load %arg1[%c0_1, %c0_2, %c0_3] : memref<1x2x32xbf16, #tpu.memory_space<vmem>>, vector<1x2x32xbf16>
    %16 = vector.shape_cast %15 : vector<1x2x32xbf16> to vector<2x32xbf16>
    %c0_4 = arith.constant 0 : index
    %c0_5 = arith.constant 0 : index
    %17 = vector.load %arg3[%c0_4, %c0_5] : memref<32x128xbf16, #tpu.memory_space<vmem>>, vector<32x128xbf16>
    %cst = arith.constant dense<0.000000e+00> : vector<2x128xf32>
    %18 = tpu.matmul %16, %17, %cst {dimension_numbers = #tpu.dot_dimension_numbers<[1], [0], [0], [1], [0, 0, 1, 1], [], []>} : vector<2x32xbf16>, vector<32x128xbf16>, vector<2x128xf32> -> vector<2x128xf32>
    %19 = vector.shape_cast %18 : vector<2x128xf32> to vector<2x1x128xf32>
    %20 = vector.shape_cast %19 : vector<2x1x128xf32> to vector<2x1x128xf32>
    %21 = vector.broadcast %20 : vector<2x1x128xf32> to vector<2x64x128xf32>
    %22 = vector.shape_cast %21 : vector<2x64x128xf32> to vector<128x128xf32>
    %c0_6 = arith.constant 0 : index
    %c0_7 = arith.constant 0 : index
    %c0_8 = arith.constant 0 : index
    %23 = vector.load %arg2[%c0_6, %c0_7, %c0_8] : memref<1x128x2xf32, #tpu.memory_space<vmem>>, vector<1x128x2xf32>
    %24 = vector.shape_cast %23 : vector<1x128x2xf32> to vector<128x2xf32>
    %25 = vector.extract_strided_slice %24 {offsets = [0, 0], sizes = [128, 1], strides = [1, 1]} : vector<128x2xf32> to vector<128x1xf32>
    %26 = vector.broadcast %25 : vector<128x1xf32> to vector<128x128xf32>
    %27 = vector.broadcast %1 : vector<1x128xf32> to vector<128x128xf32>
    %28 = arith.mulf %26, %27 : vector<128x128xf32>
    %29 = arith.addf %22, %28 : vector<128x128xf32>
    %30 = vector.extract_strided_slice %24 {offsets = [0, 1], sizes = [128, 1], strides = [1, 1]} : vector<128x2xf32> to vector<128x1xf32>
    %31 = vector.broadcast %30 : vector<128x1xf32> to vector<128x128xf32>
    %32 = vector.broadcast %2 : vector<1x128xf32> to vector<128x128xf32>
    %33 = arith.mulf %31, %32 : vector<128x128xf32>
    %34 = arith.addf %29, %33 : vector<128x128xf32>
    %35 = vector.broadcast %3 : vector<1x128xf32> to vector<128x128xf32>
    %36 = arith.addf %34, %35 : vector<128x128xf32>
    %cst_9 = arith.constant dense<0.000000e+00> : vector<128xf32>
    %37 = vector.multi_reduction <add>, %36, %cst_9 [1] : vector<128x128xf32> to vector<128xf32>
    %38 = vector.shape_cast %37 : vector<128xf32> to vector<128x1xf32>
    %cst_10 = arith.constant 0.000000e+00 : f32
    %39 = vector.broadcast %cst_10 : f32 to vector<128x128xf32>
    %40 = arith.select %14, %36, %39 : vector<128x128xi1>, vector<128x128xf32>
    %cst_11 = arith.constant dense<0.000000e+00> : vector<128xf32>
    %41 = vector.multi_reduction <add>, %40, %cst_11 [1] : vector<128x128xf32> to vector<128xf32>
    %42 = vector.shape_cast %41 : vector<128xf32> to vector<128x1xf32>
    %cst_12 = arith.constant 1.562500e-02 : f32
    %43 = vector.broadcast %cst_12 : f32 to vector<128x1xf32>
    %44 = arith.mulf %42, %43 : vector<128x1xf32>
    %45 = arith.subf %38, %42 : vector<128x1xf32>
    %cst_13 = arith.constant 1.562500e-02 : f32
    %46 = vector.broadcast %cst_13 : f32 to vector<128x1xf32>
    %47 = arith.mulf %45, %46 : vector<128x1xf32>
    %48 = vector.shape_cast %44 : vector<128x1xf32> to vector<128x1xf32>
    %49 = vector.broadcast %48 : vector<128x1xf32> to vector<128x128xf32>
    %50 = vector.shape_cast %47 : vector<128x1xf32> to vector<128x1xf32>
    %51 = vector.broadcast %50 : vector<128x1xf32> to vector<128x128xf32>
    %52 = arith.select %14, %49, %51 : vector<128x128xi1>, vector<128x128xf32>
    %53 = arith.subf %36, %52 : vector<128x128xf32>
    %54 = arith.mulf %53, %53 : vector<128x128xf32>
    %cst_14 = arith.constant dense<0.000000e+00> : vector<128xf32>
    %55 = vector.multi_reduction <add>, %54, %cst_14 [1] : vector<128x128xf32> to vector<128xf32>
    %56 = vector.shape_cast %55 : vector<128xf32> to vector<128x1xf32>
    %cst_15 = arith.constant 0.000000e+00 : f32
    %57 = vector.broadcast %cst_15 : f32 to vector<128x128xf32>
    %58 = arith.select %14, %54, %57 : vector<128x128xi1>, vector<128x128xf32>
    %cst_16 = arith.constant dense<0.000000e+00> : vector<128xf32>
    %59 = vector.multi_reduction <add>, %58, %cst_16 [1] : vector<128x128xf32> to vector<128xf32>
    %60 = vector.shape_cast %59 : vector<128xf32> to vector<128x1xf32>
    %cst_17 = arith.constant 1.562500e-02 : f32
    %61 = vector.broadcast %cst_17 : f32 to vector<128x1xf32>
    %62 = arith.mulf %60, %61 : vector<128x1xf32>
    %cst_18 = arith.constant 9.99999974E-6 : f32
    %63 = vector.broadcast %cst_18 : f32 to vector<128x1xf32>
    %64 = arith.addf %62, %63 : vector<128x1xf32>
    %65 = math.rsqrt %64 : vector<128x1xf32>
    %66 = arith.subf %56, %60 : vector<128x1xf32>
    %cst_19 = arith.constant 1.562500e-02 : f32
    %67 = vector.broadcast %cst_19 : f32 to vector<128x1xf32>
    %68 = arith.mulf %66, %67 : vector<128x1xf32>
    %cst_20 = arith.constant 9.99999974E-6 : f32
    %69 = vector.broadcast %cst_20 : f32 to vector<128x1xf32>
    %70 = arith.addf %68, %69 : vector<128x1xf32>
    %71 = math.rsqrt %70 : vector<128x1xf32>
    %72 = vector.shape_cast %65 : vector<128x1xf32> to vector<128x1xf32>
    %73 = vector.broadcast %72 : vector<128x1xf32> to vector<128x128xf32>
    %74 = vector.shape_cast %71 : vector<128x1xf32> to vector<128x1xf32>
    %75 = vector.broadcast %74 : vector<128x1xf32> to vector<128x128xf32>
    %76 = arith.select %14, %73, %75 : vector<128x128xi1>, vector<128x128xf32>
    %77 = arith.mulf %53, %76 : vector<128x128xf32>
    %78 = vector.broadcast %4 : vector<1x128xf32> to vector<128x128xf32>
    %79 = arith.mulf %77, %78 : vector<128x128xf32>
    %80 = vector.broadcast %5 : vector<1x128xf32> to vector<128x128xf32>
    %81 = arith.addf %79, %80 : vector<128x128xf32>
    %cst_21 = arith.constant 0.000000e+00 : f32
    %82 = vector.broadcast %cst_21 : f32 to vector<128x128xf32>
    %83 = arith.maximumf %81, %82 : vector<128x128xf32>
    %84 = arith.truncf %83 : vector<128x128xf32> to vector<128x128xbf16>
    %c0_22 = arith.constant 0 : index
    %c0_23 = arith.constant 0 : index
    %85 = vector.load %arg4[%c0_22, %c0_23] : memref<128x128xbf16, #tpu.memory_space<vmem>>, vector<128x128xbf16>
    %cst_24 = arith.constant dense<0.000000e+00> : vector<128x128xf32>
    %86 = tpu.matmul %84, %85, %cst_24 {dimension_numbers = #tpu.dot_dimension_numbers<[1], [0], [0], [1], [0, 0, 1, 1], [], []>} : vector<128x128xbf16>, vector<128x128xbf16>, vector<128x128xf32> -> vector<128x128xf32>
    %87 = vector.broadcast %6 : vector<1x128xf32> to vector<128x128xf32>
    %88 = arith.addf %86, %87 : vector<128x128xf32>
    %cst_25 = arith.constant dense<0.000000e+00> : vector<128xf32>
    %89 = vector.multi_reduction <add>, %88, %cst_25 [1] : vector<128x128xf32> to vector<128xf32>
    %90 = vector.shape_cast %89 : vector<128xf32> to vector<128x1xf32>
    %cst_26 = arith.constant 0.000000e+00 : f32
    %91 = vector.broadcast %cst_26 : f32 to vector<128x128xf32>
    %92 = arith.select %14, %88, %91 : vector<128x128xi1>, vector<128x128xf32>
    %cst_27 = arith.constant dense<0.000000e+00> : vector<128xf32>
    %93 = vector.multi_reduction <add>, %92, %cst_27 [1] : vector<128x128xf32> to vector<128xf32>
    %94 = vector.shape_cast %93 : vector<128xf32> to vector<128x1xf32>
    %cst_28 = arith.constant 1.562500e-02 : f32
    %95 = vector.broadcast %cst_28 : f32 to vector<128x1xf32>
    %96 = arith.mulf %94, %95 : vector<128x1xf32>
    %97 = arith.subf %90, %94 : vector<128x1xf32>
    %cst_29 = arith.constant 1.562500e-02 : f32
    %98 = vector.broadcast %cst_29 : f32 to vector<128x1xf32>
    %99 = arith.mulf %97, %98 : vector<128x1xf32>
    %100 = vector.shape_cast %96 : vector<128x1xf32> to vector<128x1xf32>
    %101 = vector.broadcast %100 : vector<128x1xf32> to vector<128x128xf32>
    %102 = vector.shape_cast %99 : vector<128x1xf32> to vector<128x1xf32>
    %103 = vector.broadcast %102 : vector<128x1xf32> to vector<128x128xf32>
    %104 = arith.select %14, %101, %103 : vector<128x128xi1>, vector<128x128xf32>
    %105 = arith.subf %88, %104 : vector<128x128xf32>
    %106 = arith.mulf %105, %105 : vector<128x128xf32>
    %cst_30 = arith.constant dense<0.000000e+00> : vector<128xf32>
    %107 = vector.multi_reduction <add>, %106, %cst_30 [1] : vector<128x128xf32> to vector<128xf32>
    %108 = vector.shape_cast %107 : vector<128xf32> to vector<128x1xf32>
    %cst_31 = arith.constant 0.000000e+00 : f32
    %109 = vector.broadcast %cst_31 : f32 to vector<128x128xf32>
    %110 = arith.select %14, %106, %109 : vector<128x128xi1>, vector<128x128xf32>
    %cst_32 = arith.constant dense<0.000000e+00> : vector<128xf32>
    %111 = vector.multi_reduction <add>, %110, %cst_32 [1] : vector<128x128xf32> to vector<128xf32>
    %112 = vector.shape_cast %111 : vector<128xf32> to vector<128x1xf32>
    %cst_33 = arith.constant 1.562500e-02 : f32
    %113 = vector.broadcast %cst_33 : f32 to vector<128x1xf32>
    %114 = arith.mulf %112, %113 : vector<128x1xf32>
    %cst_34 = arith.constant 9.99999974E-6 : f32
    %115 = vector.broadcast %cst_34 : f32 to vector<128x1xf32>
    %116 = arith.addf %114, %115 : vector<128x1xf32>
    %117 = math.rsqrt %116 : vector<128x1xf32>
    %118 = arith.subf %108, %112 : vector<128x1xf32>
    %cst_35 = arith.constant 1.562500e-02 : f32
    %119 = vector.broadcast %cst_35 : f32 to vector<128x1xf32>
    %120 = arith.mulf %118, %119 : vector<128x1xf32>
    %cst_36 = arith.constant 9.99999974E-6 : f32
    %121 = vector.broadcast %cst_36 : f32 to vector<128x1xf32>
    %122 = arith.addf %120, %121 : vector<128x1xf32>
    %123 = math.rsqrt %122 : vector<128x1xf32>
    %124 = vector.shape_cast %117 : vector<128x1xf32> to vector<128x1xf32>
    %125 = vector.broadcast %124 : vector<128x1xf32> to vector<128x128xf32>
    %126 = vector.shape_cast %123 : vector<128x1xf32> to vector<128x1xf32>
    %127 = vector.broadcast %126 : vector<128x1xf32> to vector<128x128xf32>
    %128 = arith.select %14, %125, %127 : vector<128x128xi1>, vector<128x128xf32>
    %129 = arith.mulf %105, %128 : vector<128x128xf32>
    %130 = vector.broadcast %7 : vector<1x128xf32> to vector<128x128xf32>
    %131 = arith.mulf %129, %130 : vector<128x128xf32>
    %132 = vector.broadcast %8 : vector<1x128xf32> to vector<128x128xf32>
    %133 = arith.addf %131, %132 : vector<128x128xf32>
    %cst_37 = arith.constant 0.000000e+00 : f32
    %134 = vector.broadcast %cst_37 : f32 to vector<128x128xf32>
    %135 = arith.maximumf %133, %134 : vector<128x128xf32>
    %136 = arith.truncf %135 : vector<128x128xf32> to vector<128x128xbf16>
    %137 = vector.shape_cast %135 : vector<128x128xf32> to vector<2x64x128xf32>
    %138 = vector.shape_cast %9 : vector<1x128xf32> to vector<1x1x128xf32>
    %139 = vector.broadcast %138 : vector<1x1x128xf32> to vector<2x64x128xf32>
    %140 = arith.mulf %137, %139 : vector<2x64x128xf32>
    %cst_38 = arith.constant dense<0.000000e+00> : vector<2x64xf32>
    %141 = vector.multi_reduction <add>, %140, %cst_38 [2] : vector<2x64x128xf32> to vector<2x64xf32>
    %142 = vector.broadcast %10 : vector<1x1xf32> to vector<2x64xf32>
    %143 = arith.addf %141, %142 : vector<2x64xf32>
    %cst_39 = arith.constant dense<0xFF800000> : vector<2xf32>
    %144 = vector.multi_reduction <maximumf>, %143, %cst_39 [1] : vector<2x64xf32> to vector<2xf32>
    %145 = vector.shape_cast %144 : vector<2xf32> to vector<2x1xf32>
    %146 = vector.broadcast %145 : vector<2x1xf32> to vector<2x64xf32>
    %147 = arith.subf %143, %146 : vector<2x64xf32>
    %148 = math.exp %147 : vector<2x64xf32>
    %cst_40 = arith.constant dense<0.000000e+00> : vector<2xf32>
    %149 = vector.multi_reduction <add>, %148, %cst_40 [1] : vector<2x64xf32> to vector<2xf32>
    %150 = vector.shape_cast %149 : vector<2xf32> to vector<2x1xf32>
    %151 = tpu.reciprocal %150 {approx = true} : vector<2x1xf32> -> vector<2x1xf32>
    %152 = vector.broadcast %151 : vector<2x1xf32> to vector<2x64xf32>
    %153 = arith.mulf %148, %152 : vector<2x64xf32>
    %c0_41 = arith.constant 0 : index
    %c0_42 = arith.constant 0 : index
    %c0_43 = arith.constant 0 : index
    %154 = vector.load %arg7[%c0_41, %c0_42, %c0_43] : memref<1x2x64xf32, #tpu.memory_space<vmem>>, vector<1x2x64xf32>
    %155 = vector.shape_cast %154 : vector<1x2x64xf32> to vector<2x64xf32>
    %156 = vector.shape_cast %153 : vector<2x64xf32> to vector<1x2x64xf32>
    tpu.vector_store %arg7[%c0_41, %c0_42, %c0_43], %156 {strides = array<i32>} : memref<1x2x64xf32, #tpu.memory_space<vmem>>, vector<1x2x64xf32>,
    %c0_44 = arith.constant 0 : index
    %c0_45 = arith.constant 0 : index
    %157 = vector.load %arg5[%c0_44, %c0_45] : memref<128x2xbf16, #tpu.memory_space<vmem>>, vector<128x2xbf16>
    %cst_46 = arith.constant dense<0.000000e+00> : vector<128x2xf32>
    %158 = tpu.matmul %136, %157, %cst_46 {dimension_numbers = #tpu.dot_dimension_numbers<[1], [0], [0], [1], [0, 0, 1, 1], [], []>} : vector<128x128xbf16>, vector<128x2xbf16>, vector<128x2xf32> -> vector<128x2xf32>
    %159 = vector.broadcast %11 : vector<1x2xf32> to vector<128x2xf32>
    %160 = arith.addf %158, %159 : vector<128x2xf32>
    %c0_47 = arith.constant 0 : index
    %c0_48 = arith.constant 0 : index
    %c0_49 = arith.constant 0 : index
    %161 = vector.load %arg8[%c0_47, %c0_48, %c0_49] : memref<1x128x2xf32, #tpu.memory_space<vmem>>, vector<1x128x2xf32>
    %162 = vector.shape_cast %161 : vector<1x128x2xf32> to vector<128x2xf32>
    %163 = vector.shape_cast %160 : vector<128x2xf32> to vector<1x128x2xf32>
    tpu.vector_store %arg8[%c0_47, %c0_48, %c0_49], %163 {strides = array<i32>} : memref<1x128x2xf32, #tpu.memory_space<vmem>>, vector<1x128x2xf32>,
    return
  }
  func.func @transform_0(%arg0: i32) -> (i32, i32, i32) {
    %c0_i32 = arith.constant 0 : i32
    %c0_i32_0 = arith.constant 0 : i32
    %c0_i32_1 = arith.constant 0 : i32
    return %arg0, %c0_i32, %c0_i32_0 : i32, i32, i32
  }
  func.func @transform_1(%arg0: i32) -> (i32, i32, i32) {
    %c0_i32 = arith.constant 0 : i32
    %c0_i32_0 = arith.constant 0 : i32
    %c0_i32_1 = arith.constant 0 : i32
    return %arg0, %c0_i32, %c0_i32_0 : i32, i32, i32
  }
  func.func @transform_2(%arg0: i32) -> (i32, i32) {
    %c0_i32 = arith.constant 0 : i32
    %c0_i32_0 = arith.constant 0 : i32
    %c0_i32_1 = arith.constant 0 : i32
    return %c0_i32, %c0_i32_0 : i32, i32
  }
  func.func @transform_3(%arg0: i32) -> (i32, i32) {
    %c0_i32 = arith.constant 0 : i32
    %c0_i32_0 = arith.constant 0 : i32
    %c0_i32_1 = arith.constant 0 : i32
    return %c0_i32, %c0_i32_0 : i32, i32
  }
  func.func @transform_4(%arg0: i32) -> (i32, i32) {
    %c0_i32 = arith.constant 0 : i32
    %c0_i32_0 = arith.constant 0 : i32
    %c0_i32_1 = arith.constant 0 : i32
    return %c0_i32, %c0_i32_0 : i32, i32
  }
  func.func @transform_5(%arg0: i32) -> (i32, i32) {
    %c0_i32 = arith.constant 0 : i32
    %c0_i32_0 = arith.constant 0 : i32
    %c0_i32_1 = arith.constant 0 : i32
    return %c0_i32, %c0_i32_0 : i32, i32
  }
  func.func @transform_6(%arg0: i32) -> (i32, i32, i32) {
    %c0_i32 = arith.constant 0 : i32
    %c0_i32_0 = arith.constant 0 : i32
    %c0_i32_1 = arith.constant 0 : i32
    return %arg0, %c0_i32, %c0_i32_0 : i32, i32, i32
  }
  func.func @transform_7(%arg0: i32) -> (i32, i32, i32) {
    %c0_i32 = arith.constant 0 : i32
    %c0_i32_0 = arith.constant 0 : i32
    %c0_i32_1 = arith.constant 0 : i32
    return %arg0, %c0_i32, %c0_i32_0 : i32, i32, i32
  }
}

</mosaic_0001>

<llo_original>
// kernel: target_pred_forward.1
$region0: #{target_pred_forward.1}
  #allocation0 [shape = 'u32[]', space=smem, size = 0x4, offset = 0x4, fixed_abs, tag = 'smem constant byte address 0x4 - core index']
  #allocation1 [shape = 'u32[144,128]{1,0:T(1,128)}', space=vmem, size = 0x12000, scoped, tag = 'internal scratch']
  %s0 = inlined_call_operand.vmem [shape: bf16[1,2,32], index: 0, kind: input, shape index: {}]
  %s1 = inlined_call_operand.vmem [shape: f32[1,128,2], index: 1, kind: input, shape index: {}]
  %s2 = inlined_call_operand.vmem [shape: bf16[32,128], index: 2, kind: input, shape index: {}]
  %s3 = inlined_call_operand.vmem [shape: bf16[128,128], index: 3, kind: input, shape index: {}]
  %s4 = inlined_call_operand.vmem [shape: bf16[128,2], index: 4, kind: input, shape index: {}]
  %s5 = inlined_call_operand.vmem [shape: f32[10,128], index: 5, kind: input, shape index: {}]
  %s6 = inlined_call_operand.hbm [shape: f32[1,2,64], index: 6, kind: output, shape index: {0}]
  %s7 = inlined_call_operand.vmem [shape: f32[1,128,2], index: 7, kind: output, shape index: {1}]
  %8 = xla_tuple %s6, %s7
  %s9 = sld [smem:[#allocation0]]
  $region42: #{target_pred_forward.1} parent=0
    _
  %s11 = ssub.s32 1, %s9
  %s12 = scalar_select 0, %s11, %s9
  $region1: #{target_pred_forward.1} parent=0
    #allocation2 [shape = 'u8[1024]{0}', space=vmem, size = 0x400, scoped, tag = 'output window, operand 0, single buffered']
    #allocation3 [shape = 's32[1]{0}', space=sflag, size = 0x4, scoped, tag = 'scoped memory for target_pred_forward.1']
    %13 = vsyncpa [#allocation3], 0
    // Predicated region
    $region2: #{target_pred_forward.1} parent=1 // pred_check
      _
    $region3: #{target_pred_forward.1} parent=1 // pred_check_branch
      %15 = sbr.rel (0) target = $region5
    $region4: #{target_pred_forward.1} parent=1 // pred_region
      _
    $region5: #{target_pred_forward.1} parent=1 // pred_fallthru
      _
    // Predicated region
    $region6: #{target_pred_forward.1} parent=1 // pred_check
      _
    $region7: #{target_pred_forward.1} parent=1 // pred_check_branch
      %17 = sbr.rel (0) target = $region9
    $region8: #{target_pred_forward.1} parent=1 // pred_region
      _
    $region9: #{target_pred_forward.1} parent=1 // pred_fallthru
      _
    // Predicated region
    $region10: #{target_pred_forward.1} parent=1 // pred_check
      _
    $region11: #{target_pred_forward.1} parent=1 // pred_check_branch
      %19 = sbr.rel (0) target = $region13
    $region12: #{target_pred_forward.1} parent=1 // pred_region
      _
    $region13: #{target_pred_forward.1} parent=1 // pred_fallthru
      _
    // Predicated region
    $region14: #{target_pred_forward.1} parent=1 // pred_check
      _
    $region15: #{target_pred_forward.1} parent=1 // pred_check_branch
      %21 = sbr.rel (0) target = $region17
    $region16: #{target_pred_forward.1} parent=1 // pred_region
      _
    $region17: #{target_pred_forward.1} parent=1 // pred_fallthru
      _
    // Predicated region
    $region18: #{target_pred_forward.1} parent=1 // pred_check
      _
    $region19: #{target_pred_forward.1} parent=1 // pred_check_branch
      %23 = sbr.rel (0) target = $region21
    $region20: #{target_pred_forward.1} parent=1 // pred_region
      _
    $region21: #{target_pred_forward.1} parent=1 // pred_fallthru
      _
    // Predicated region
    $region22: #{target_pred_forward.1} parent=1 // pred_check
      _
    $region23: #{target_pred_forward.1} parent=1 // pred_check_branch
      %25 = sbr.rel (0) target = $region25
    $region24: #{target_pred_forward.1} parent=1 // pred_region
      _
    $region25: #{target_pred_forward.1} parent=1 // pred_fallthru
      _
    %v27 = vld [vmem:[%s5] sm:$0xff]
    %v28 = vld [vmem:[%s5 + $0x8] sm:$0x3]
    %v29 = vlaneseq
    %v30 = vand.u32 %v29, 127
    %vm31 = vcmp.lt.s32.totalorder %v30, 64
    %v32 = vld [vmem:[%s0] sm:$0x1]
    %v33 = vld [vmem:[%s2] sm:$0xf]
    %v34 = vld [vmem:[%s2 + $0x4] sm:$0xf]
    %v35 = vld [vmem:[%s2 + $0x8] sm:$0xf]
    %v36 = vld [vmem:[%s2 + $0xc] sm:$0xf]
    %v41 = vunpack.c.l.b16 %v33
    %v42 = vunpack.c.l.b16 %v34
    %v43 = vunpack.c.l.b16 %v35
    %v44 = vunpack.c.l.b16 %v36
    %v45 = vpack.c.b16 %v42, %v41
    %v46 = vpack.c.b16 %v44, %v43
    %vm49 = vcmask 261120
    %v51 = vsel %vm49, %v32, 0
    %53 = vmatprep.subr.bf16.mxu0 0
    %54 = vmatpush1.bf16.msra.mxu0 %v45
    %55 = vmatprep.subr.bf16.mxu0 0
    %56 = vmatpush1.bf16.msra.mxu0 %v46
    %57 = vmatprep.subr.bf16.mxu0 0
    %58 = vmatpush1.bf16.msra.mxu0 0
    %59 = vmatprep.subr.bf16.mxu0 0
    %60 = vmatpush1.bf16.msra.mxu0 0
    %61 = vmatprep.subr.bf16.mxu0 0
    %62 = vmatpush1.bf16.msra.mxu0 0
    %63 = vmatprep.subr.bf16.mxu0 0
    %64 = vmatpush1.bf16.msra.mxu0 0
    %65 = vmatprep.subr.bf16.mxu0 0
    %66 = vmatpush1.bf16.msra.mxu0 0
    %67 = vmatprep.subr.bf16.mxu0 0
    %68 = vmatpush1.bf16.msra.mxu0 0
    %69 = vmatprep.subr.bf16.mxu0 0
    %70 = vmatpush1.bf16.msra.mxu0 0
    %71 = vmatprep.subr.bf16.mxu0 0
    %72 = vmatpush1.bf16.msra.mxu0 0
    %73 = vmatprep.subr.bf16.mxu0 0
    %74 = vmatpush1.bf16.msra.mxu0 0
    %75 = vmatprep.subr.bf16.mxu0 0
    %76 = vmatpush1.bf16.msra.mxu0 0
    %77 = vmatprep.subr.bf16.mxu0 0
    %78 = vmatpush1.bf16.msra.mxu0 0
    %79 = vmatprep.subr.bf16.mxu0 0
    %80 = vmatpush1.bf16.msra.mxu0 0
    %81 = vmatprep.subr.bf16.mxu0 0
    %82 = vmatpush1.bf16.msra.mxu0 0
    %83 = vmatprep.subr.bf16.mxu0 0
    %84 = vmatpush1.bf16.msra.mxu0 0
    %85 = vmatprep.mubr.bf16.mxu0 0
    %86 = vmatmul.mubr.bf16.gmra.mrb[0].mxu0 %v51
    %v87 = vpop.f32.mrb[0].mxu0
    %v88 = vadd.f32 0.0, %v87
    %v89 = vpop.f32.mrb[0].mxu0
    %v90 = vpop.f32.mrb[0].mxu0
    %v91 = vpop.f32.mrb[0].mxu0
    %92 = vdwg.mxu0
    %v95 = vunpack.c.l.s4 1966171168
    %v96 = vunpack.c.0.s8 %v95
    %v97 = vlaneseq
    %v98 = vshrl.u32 %v97, 7
    %v99 = vsub.s32 %v96, %v98
    %v100 = vrot.slane %v88, %v99
    %v101 = vcombine.high %v100, %v100
    %v103 = vunpack.c.l.s4 1966171168
    %v104 = vunpack.c.0.s8 %v103
    %v105 = vlaneseq
    %v106 = vshrl.u32 %v105, 7
    %v107 = vsub.s32 %v104, %v106
    %v108 = vrot.slane %v100, %v107
    %v110 = vunpack.c.l.s4 1966171168
    %v111 = vunpack.c.0.s8 %v110
    %v112 = vlaneseq
    %v113 = vshrl.u32 %v112, 7
    %v114 = vsub.s32 %v111, %v113
    %v115 = vrot.slane %v101, %v114
    %v116 = vlaneseq
    %v117 = vshrl.u32 %v116, 7
    %v118 = vsub.s32 0, %v117
    %v119 = vrot.slane %v108, %v118
    %v120 = vlaneseq
    %v121 = vshrl.u32 %v120, 7
    %v122 = vsub.s32 0, %v121
    %v123 = vrot.slane %v115, %v122
    %v126 = vld [vmem:[%s1] sm:$0xff]
    %v127 = vld [vmem:[%s1 + $0x8] sm:$0xff]
    %v128 = vld [vmem:[%s1 + $0x10] sm:$0xff]
    %v129 = vld [vmem:[%s1 + $0x18] sm:$0xff]
    %v130 = vld [vmem:[%s1 + $0x20] sm:$0xff]
    %v131 = vld [vmem:[%s1 + $0x28] sm:$0xff]
    %v132 = vld [vmem:[%s1 + $0x30] sm:$0xff]
    %v133 = vld [vmem:[%s1 + $0x38] sm:$0xff]
    %v134 = vld [vmem:[%s1 + $0x40] sm:$0xff]
    %v135 = vld [vmem:[%s1 + $0x48] sm:$0xff]
    %v136 = vld [vmem:[%s1 + $0x50] sm:$0xff]
    %v137 = vld [vmem:[%s1 + $0x58] sm:$0xff]
    %v138 = vld [vmem:[%s1 + $0x60] sm:$0xff]
    %v139 = vld [vmem:[%s1 + $0x68] sm:$0xff]
    %v140 = vld [vmem:[%s1 + $0x70] sm:$0xff]
    %v141 = vld [vmem:[%s1 + $0x78] sm:$0xff]
    %143 = vset.pattern.permute.xlu0 0
    %144 = vperm.xlu0 %143, %v126
    %v145 = vpop.permute.xlu0 %144
    %148 = vset.pattern.permute.xlu0 0
    %149 = vperm.xlu0 %148, %v127
    %v150 = vpop.permute.xlu0 %149
    %153 = vset.pattern.permute.xlu0 0
    %154 = vperm.xlu0 %153, %v128
    %v155 = vpop.permute.xlu0 %154
    %158 = vset.pattern.permute.xlu0 0
    %159 = vperm.xlu0 %158, %v129
    %v160 = vpop.permute.xlu0 %159
    %163 = vset.pattern.permute.xlu0 0
    %164 = vperm.xlu0 %163, %v130
    %v165 = vpop.permute.xlu0 %164
    %168 = vset.pattern.permute.xlu0 0
    %169 = vperm.xlu0 %168, %v131
    %v170 = vpop.permute.xlu0 %169
    %173 = vset.pattern.permute.xlu0 0
    %174 = vperm.xlu0 %173, %v132
    %v175 = vpop.permute.xlu0 %174
    %178 = vset.pattern.permute.xlu0 0
    %179 = vperm.xlu0 %178, %v133
    %v180 = vpop.permute.xlu0 %179
    %183 = vset.pattern.permute.xlu0 0
    %184 = vperm.xlu0 %183, %v134
    %v185 = vpop.permute.xlu0 %184
    %188 = vset.pattern.permute.xlu0 0
    %189 = vperm.xlu0 %188, %v135
    %v190 = vpop.permute.xlu0 %189
    %193 = vset.pattern.permute.xlu0 0
    %194 = vperm.xlu0 %193, %v136
    %v195 = vpop.permute.xlu0 %194
    %198 = vset.pattern.permute.xlu0 0
    %199 = vperm.xlu0 %198, %v137
    %v200 = vpop.permute.xlu0 %199
    %203 = vset.pattern.permute.xlu0 0
    %204 = vperm.xlu0 %203, %v138
    %v205 = vpop.permute.xlu0 %204
    %208 = vset.pattern.permute.xlu0 0
    %209 = vperm.xlu0 %208, %v139
    %v210 = vpop.permute.xlu0 %209
    %213 = vset.pattern.permute.xlu0 0
    %214 = vperm.xlu0 %213, %v140
    %v215 = vpop.permute.xlu0 %214
    %218 = vset.pattern.permute.xlu0 0
    %219 = vperm.xlu0 %218, %v141
    %v220 = vpop.permute.xlu0 %219
    %v222 = vlaneseq
    %v223 = vshrl.u32 %v222, 7
    %v224 = vsub.s32 0, %v223
    %v225 = vrot.slane %v27, %v224
    %v226 = vmul.f32 %v145, %v225
    %v227 = vmul.f32 %v150, %v225
    %v228 = vmul.f32 %v155, %v225
    %v229 = vmul.f32 %v160, %v225
    %v230 = vmul.f32 %v165, %v225
    %v231 = vmul.f32 %v170, %v225
    %v232 = vmul.f32 %v175, %v225
    %v233 = vmul.f32 %v180, %v225
    %v234 = vmul.f32 %v185, %v225
    %v235 = vmul.f32 %v190, %v225
    %v236 = vmul.f32 %v195, %v225
    %v237 = vmul.f32 %v200, %v225
    %v238 = vmul.f32 %v205, %v225
    %v239 = vmul.f32 %v210, %v225
    %v240 = vmul.f32 %v215, %v225
    %v241 = vmul.f32 %v220, %v225
    %v242 = vadd.f32 %v119, %v226
    %v243 = vadd.f32 %v119, %v227
    %v244 = vadd.f32 %v119, %v228
    %v245 = vadd.f32 %v119, %v229
    %v246 = vadd.f32 %v119, %v230
    %v247 = vadd.f32 %v119, %v231
    %v248 = vadd.f32 %v119, %v232
    %v249 = vadd.f32 %v119, %v233
    %v250 = vadd.f32 %v123, %v234
    %v251 = vadd.f32 %v123, %v235
    %v252 = vadd.f32 %v123, %v236
    %v253 = vadd.f32 %v123, %v237
    %v254 = vadd.f32 %v123, %v238
    %v255 = vadd.f32 %v123, %v239
    %v256 = vadd.f32 %v123, %v240
    %v257 = vadd.f32 %v123, %v241
    %258 = vset.pattern.permute.xlu0 1
    %259 = vperm.xlu0 %258, %v126
    %v260 = vpop.permute.xlu0 %259
    %262 = vset.pattern.permute.xlu0 1
    %263 = vperm.xlu0 %262, %v127
    %v264 = vpop.permute.xlu0 %263
    %266 = vset.pattern.permute.xlu0 1
    %267 = vperm.xlu0 %266, %v128
    %v268 = vpop.permute.xlu0 %267
    %270 = vset.pattern.permute.xlu0 1
    %271 = vperm.xlu0 %270, %v129
    %v272 = vpop.permute.xlu0 %271
    %274 = vset.pattern.permute.xlu0 1
    %275 = vperm.xlu0 %274, %v130
    %v276 = vpop.permute.xlu0 %275
    %278 = vset.pattern.permute.xlu0 1
    %279 = vperm.xlu0 %278, %v131
    %v280 = vpop.permute.xlu0 %279
    %282 = vset.pattern.permute.xlu0 1
    %283 = vperm.xlu0 %282, %v132
    %v284 = vpop.permute.xlu0 %283
    %286 = vset.pattern.permute.xlu0 1
    %287 = vperm.xlu0 %286, %v133
    %v288 = vpop.permute.xlu0 %287
    %290 = vset.pattern.permute.xlu0 1
    %291 = vperm.xlu0 %290, %v134
    %v292 = vpop.permute.xlu0 %291
    %294 = vset.pattern.permute.xlu0 1
    %295 = vperm.xlu0 %294, %v135
    %v296 = vpop.permute.xlu0 %295
    %298 = vset.pattern.permute.xlu0 1
    %299 = vperm.xlu0 %298, %v136
    %v300 = vpop.permute.xlu0 %299
    %302 = vset.pattern.permute.xlu0 1
    %303 = vperm.xlu0 %302, %v137
    %v304 = vpop.permute.xlu0 %303
    %306 = vset.pattern.permute.xlu0 1
    %307 = vperm.xlu0 %306, %v138
    %v308 = vpop.permute.xlu0 %307
    %310 = vset.pattern.permute.xlu0 1
    %311 = vperm.xlu0 %310, %v139
    %v312 = vpop.permute.xlu0 %311
    %314 = vset.pattern.permute.xlu0 1
    %315 = vperm.xlu0 %314, %v140
    %v316 = vpop.permute.xlu0 %315
    %318 = vset.pattern.permute.xlu0 1
    %319 = vperm.xlu0 %318, %v141
    %v320 = vpop.permute.xlu0 %319
    %v322 = vlaneseq
    %v323 = vshrl.u32 %v322, 7
    %v324 = vsub.s32 1, %v323
    %v325 = vrot.slane %v27, %v324
    %v326 = vmul.f32 %v260, %v325
    %v327 = vmul.f32 %v264, %v325
    %v328 = vmul.f32 %v268, %v325
    %v329 = vmul.f32 %v272, %v325
    %v330 = vmul.f32 %v276, %v325
    %v331 = vmul.f32 %v280, %v325
    %v332 = vmul.f32 %v284, %v325
    %v333 = vmul.f32 %v288, %v325
    %v334 = vmul.f32 %v292, %v325
    %v335 = vmul.f32 %v296, %v325
    %v336 = vmul.f32 %v300, %v325
    %v337 = vmul.f32 %v304, %v325
    %v338 = vmul.f32 %v308, %v325
    %v339 = vmul.f32 %v312, %v325
    %v340 = vmul.f32 %v316, %v325
    %v341 = vmul.f32 %v320, %v325
    %v342 = vadd.f32 %v242, %v326
    %v343 = vadd.f32 %v243, %v327
    %v344 = vadd.f32 %v244, %v328
    %v345 = vadd.f32 %v245, %v329
    %v346 = vadd.f32 %v246, %v330
    %v347 = vadd.f32 %v247, %v331
    %v348 = vadd.f32 %v248, %v332
    %v349 = vadd.f32 %v249, %v333
    %v350 = vadd.f32 %v250, %v334
    %v351 = vadd.f32 %v251, %v335
    %v352 = vadd.f32 %v252, %v336
    %v353 = vadd.f32 %v253, %v337
    %v354 = vadd.f32 %v254, %v338
    %v355 = vadd.f32 %v255, %v339
    %v356 = vadd.f32 %v256, %v340
    %v357 = vadd.f32 %v257, %v341
    %v358 = vlaneseq
    %v359 = vshrl.u32 %v358, 7
    %v360 = vsub.s32 2, %v359
    %v361 = vrot.slane %v27, %v360
    %v362 = vadd.f32 %v342, %v361
    %v363 = vadd.f32 %v343, %v361
    %v364 = vadd.f32 %v344, %v361
    %v365 = vadd.f32 %v345, %v361
    %v366 = vadd.f32 %v346, %v361
    %v367 = vadd.f32 %v347, %v361
    %v368 = vadd.f32 %v348, %v361
    %v369 = vadd.f32 %v349, %v361
    %v370 = vadd.f32 %v350, %v361
    %v371 = vadd.f32 %v351, %v361
    %v372 = vadd.f32 %v352, %v361
    %v373 = vadd.f32 %v353, %v361
    %v374 = vadd.f32 %v354, %v361
    %v375 = vadd.f32 %v355, %v361
    %v376 = vadd.f32 %v356, %v361
    %v377 = vadd.f32 %v357, %v361
    %378 = vadd.xlane.f32.xlu0 %v362
    %v379 = vpop.xlane.xlu0 %378
    %380 = vadd.xlane.f32.xlu0 %v363
    %v381 = vpop.xlane.xlu0 %380
    %382 = vadd.xlane.f32.xlu0 %v364
    %v383 = vpop.xlane.xlu0 %382
    %384 = vadd.xlane.f32.xlu0 %v365
    %v385 = vpop.xlane.xlu0 %384
    %386 = vadd.xlane.f32.xlu0 %v366
    %v387 = vpop.xlane.xlu0 %386
    %388 = vadd.xlane.f32.xlu0 %v367
    %v389 = vpop.xlane.xlu0 %388
    %390 = vadd.xlane.f32.xlu0 %v368
    %v391 = vpop.xlane.xlu0 %390
    %392 = vadd.xlane.f32.xlu0 %v369
    %v393 = vpop.xlane.xlu0 %392
    %394 = vadd.xlane.f32.xlu0 %v370
    %v395 = vpop.xlane.xlu0 %394
    %396 = vadd.xlane.f32.xlu0 %v371
    %v397 = vpop.xlane.xlu0 %396
    %398 = vadd.xlane.f32.xlu0 %v372
    %v399 = vpop.xlane.xlu0 %398
    %400 = vadd.xlane.f32.xlu0 %v373
    %v401 = vpop.xlane.xlu0 %400
    %402 = vadd.xlane.f32.xlu0 %v374
    %v403 = vpop.xlane.xlu0 %402
    %404 = vadd.xlane.f32.xlu0 %v375
    %v405 = vpop.xlane.xlu0 %404
    %406 = vadd.xlane.f32.xlu0 %v376
    %v407 = vpop.xlane.xlu0 %406
    %408 = vadd.xlane.f32.xlu0 %v377
    %v409 = vpop.xlane.xlu0 %408
    %v410 = vsel %vm31, %v362, 0.0
    %v411 = vsel %vm31, %v363, 0.0
    %v412 = vsel %vm31, %v364, 0.0
    %v413 = vsel %vm31, %v365, 0.0
    %v414 = vsel %vm31, %v366, 0.0
    %v415 = vsel %vm31, %v367, 0.0
    %v416 = vsel %vm31, %v368, 0.0
    %v417 = vsel %vm31, %v369, 0.0
    %v418 = vsel %vm31, %v370, 0.0
    %v419 = vsel %vm31, %v371, 0.0
    %v420 = vsel %vm31, %v372, 0.0
    %v421 = vsel %vm31, %v373, 0.0
    %v422 = vsel %vm31, %v374, 0.0
    %v423 = vsel %vm31, %v375, 0.0
    %v424 = vsel %vm31, %v376, 0.0
    %v425 = vsel %vm31, %v377, 0.0
    %426 = vadd.xlane.f32.xlu0 %v410
    %v427 = vpop.xlane.xlu0 %426
    %428 = vadd.xlane.f32.xlu0 %v411
    %v429 = vpop.xlane.xlu0 %428
    %430 = vadd.xlane.f32.xlu0 %v412
    %v431 = vpop.xlane.xlu0 %430
    %432 = vadd.xlane.f32.xlu0 %v413
    %v433 = vpop.xlane.xlu0 %432
    %434 = vadd.xlane.f32.xlu0 %v414
    %v435 = vpop.xlane.xlu0 %434
    %436 = vadd.xlane.f32.xlu0 %v415
    %v437 = vpop.xlane.xlu0 %436
    %438 = vadd.xlane.f32.xlu0 %v416
    %v439 = vpop.xlane.xlu0 %438
    %440 = vadd.xlane.f32.xlu0 %v417
    %v441 = vpop.xlane.xlu0 %440
    %442 = vadd.xlane.f32.xlu0 %v418
    %v443 = vpop.xlane.xlu0 %442
    %444 = vadd.xlane.f32.xlu0 %v419
    %v445 = vpop.xlane.xlu0 %444
    %446 = vadd.xlane.f32.xlu0 %v420
    %v447 = vpop.xlane.xlu0 %446
    %448 = vadd.xlane.f32.xlu0 %v421
    %v449 = vpop.xlane.xlu0 %448
    %450 = vadd.xlane.f32.xlu0 %v422
    %v451 = vpop.xlane.xlu0 %450
    %452 = vadd.xlane.f32.xlu0 %v423
    %v453 = vpop.xlane.xlu0 %452
    %454 = vadd.xlane.f32.xlu0 %v424
    %v455 = vpop.xlane.xlu0 %454
    %456 = vadd.xlane.f32.xlu0 %v425
    %v457 = vpop.xlane.xlu0 %456
    %v458 = vmul.f32 %v427, 0.015625
    %v459 = vmul.f32 %v429, 0.015625
    %v460 = vmul.f32 %v431, 0.015625
    %v461 = vmul.f32 %v433, 0.015625
    %v462 = vmul.f32 %v435, 0.015625
    %v463 = vmul.f32 %v437, 0.015625
    %v464 = vmul.f32 %v439, 0.015625
    %v465 = vmul.f32 %v441, 0.015625
    %v466 = vmul.f32 %v443, 0.015625
    %v467 = vmul.f32 %v445, 0.015625
    %v468 = vmul.f32 %v447, 0.015625
    %v469 = vmul.f32 %v449, 0.015625
    %v470 = vmul.f32 %v451, 0.015625
    %v471 = vmul.f32 %v453, 0.015625
    %v472 = vmul.f32 %v455, 0.015625
    %v473 = vmul.f32 %v457, 0.015625
    %v474 = vsub.f32 %v379, %v427
    %v475 = vsub.f32 %v381, %v429
    %v476 = vsub.f32 %v383, %v431
    %v477 = vsub.f32 %v385, %v433
    %v478 = vsub.f32 %v387, %v435
    %v479 = vsub.f32 %v389, %v437
    %v480 = vsub.f32 %v391, %v439
    %v481 = vsub.f32 %v393, %v441
    %v482 = vsub.f32 %v395, %v443
    %v483 = vsub.f32 %v397, %v445
    %v484 = vsub.f32 %v399, %v447
    %v485 = vsub.f32 %v401, %v449
    %v486 = vsub.f32 %v403, %v451
    %v487 = vsub.f32 %v405, %v453
    %v488 = vsub.f32 %v407, %v455
    %v489 = vsub.f32 %v409, %v457
    %v490 = vmul.f32 %v474, 0.015625
    %v491 = vmul.f32 %v475, 0.015625
    %v492 = vmul.f32 %v476, 0.015625
    %v493 = vmul.f32 %v477, 0.015625
    %v494 = vmul.f32 %v478, 0.015625
    %v495 = vmul.f32 %v479, 0.015625
    %v496 = vmul.f32 %v480, 0.015625
    %v497 = vmul.f32 %v481, 0.015625
    %v498 = vmul.f32 %v482, 0.015625
    %v499 = vmul.f32 %v483, 0.015625
    %v500 = vmul.f32 %v484, 0.015625
    %v501 = vmul.f32 %v485, 0.015625
    %v502 = vmul.f32 %v486, 0.015625
    %v503 = vmul.f32 %v487, 0.015625
    %v504 = vmul.f32 %v488, 0.015625
    %v505 = vmul.f32 %v489, 0.015625
    %v506 = vsel %vm31, %v458, %v490
    %v507 = vsel %vm31, %v459, %v491
    %v508 = vsel %vm31, %v460, %v492
    %v509 = vsel %vm31, %v461, %v493
    %v510 = vsel %vm31, %v462, %v494
    %v511 = vsel %vm31, %v463, %v495
    %v512 = vsel %vm31, %v464, %v496
    %v513 = vsel %vm31, %v465, %v497
    %v514 = vsel %vm31, %v466, %v498
    %v515 = vsel %vm31, %v467, %v499
    %v516 = vsel %vm31, %v468, %v500
    %v517 = vsel %vm31, %v469, %v501
    %v518 = vsel %vm31, %v470, %v502
    %v519 = vsel %vm31, %v471, %v503
    %v520 = vsel %vm31, %v472, %v504
    %v521 = vsel %vm31, %v473, %v505
    %v522 = vsub.f32 %v362, %v506
    %v523 = vsub.f32 %v363, %v507
    %v524 = vsub.f32 %v364, %v508
    %v525 = vsub.f32 %v365, %v509
    %v526 = vsub.f32 %v366, %v510
    %v527 = vsub.f32 %v367, %v511
    %v528 = vsub.f32 %v368, %v512
    %v529 = vsub.f32 %v369, %v513
    %v530 = vsub.f32 %v370, %v514
    %v531 = vsub.f32 %v371, %v515
    %v532 = vsub.f32 %v372, %v516
    %v533 = vsub.f32 %v373, %v517
    %v534 = vsub.f32 %v374, %v518
    %v535 = vsub.f32 %v375, %v519
    %v536 = vsub.f32 %v376, %v520
    %v537 = vsub.f32 %v377, %v521
    %v538 = vmul.f32 %v522, %v522
    %v539 = vmul.f32 %v523, %v523
    %v540 = vmul.f32 %v524, %v524
    %v541 = vmul.f32 %v525, %v525
    %v542 = vmul.f32 %v526, %v526
    %v543 = vmul.f32 %v527, %v527
    %v544 = vmul.f32 %v528, %v528
    %v545 = vmul.f32 %v529, %v529
    %v546 = vmul.f32 %v530, %v530
    %v547 = vmul.f32 %v531, %v531
    %v548 = vmul.f32 %v532, %v532
    %v549 = vmul.f32 %v533, %v533
    %v550 = vmul.f32 %v534, %v534
    %v551 = vmul.f32 %v535, %v535
    %v552 = vmul.f32 %v536, %v536
    %v553 = vmul.f32 %v537, %v537
    %554 = vadd.xlane.f32.xlu0 %v538
    %v555 = vpop.xlane.xlu0 %554
    %556 = vadd.xlane.f32.xlu0 %v539
    %v557 = vpop.xlane.xlu0 %556
    %558 = vadd.xlane.f32.xlu0 %v540
    %v559 = vpop.xlane.xlu0 %558
    %560 = vadd.xlane.f32.xlu0 %v541
    %v561 = vpop.xlane.xlu0 %560
    %562 = vadd.xlane.f32.xlu0 %v542
    %v563 = vpop.xlane.xlu0 %562
    %564 = vadd.xlane.f32.xlu0 %v543
    %v565 = vpop.xlane.xlu0 %564
    %566 = vadd.xlane.f32.xlu0 %v544
    %v567 = vpop.xlane.xlu0 %566
    %568 = vadd.xlane.f32.xlu0 %v545
    %v569 = vpop.xlane.xlu0 %568
    %570 = vadd.xlane.f32.xlu0 %v546
    %v571 = vpop.xlane.xlu0 %570
    %572 = vadd.xlane.f32.xlu0 %v547
    %v573 = vpop.xlane.xlu0 %572
    %574 = vadd.xlane.f32.xlu0 %v548
    %v575 = vpop.xlane.xlu0 %574
    %576 = vadd.xlane.f32.xlu0 %v549
    %v577 = vpop.xlane.xlu0 %576
    %578 = vadd.xlane.f32.xlu0 %v550
    %v579 = vpop.xlane.xlu0 %578
    %580 = vadd.xlane.f32.xlu0 %v551
    %v581 = vpop.xlane.xlu0 %580
    %582 = vadd.xlane.f32.xlu0 %v552
    %v583 = vpop.xlane.xlu0 %582
    %584 = vadd.xlane.f32.xlu0 %v553
    %v585 = vpop.xlane.xlu0 %584
    %v586 = vsel %vm31, %v538, 0.0
    %v587 = vsel %vm31, %v539, 0.0
    %v588 = vsel %vm31, %v540, 0.0
    %v589 = vsel %vm31, %v541, 0.0
    %v590 = vsel %vm31, %v542, 0.0
    %v591 = vsel %vm31, %v543, 0.0
    %v592 = vsel %vm31, %v544, 0.0
    %v593 = vsel %vm31, %v545, 0.0
    %v594 = vsel %vm31, %v546, 0.0
    %v595 = vsel %vm31, %v547, 0.0
    %v596 = vsel %vm31, %v548, 0.0
    %v597 = vsel %vm31, %v549, 0.0
    %v598 = vsel %vm31, %v550, 0.0
    %v599 = vsel %vm31, %v551, 0.0
    %v600 = vsel %vm31, %v552, 0.0
    %v601 = vsel %vm31, %v553, 0.0
    %602 = vadd.xlane.f32.xlu0 %v586
    %v603 = vpop.xlane.xlu0 %602
    %604 = vadd.xlane.f32.xlu0 %v587
    %v605 = vpop.xlane.xlu0 %604
    %606 = vadd.xlane.f32.xlu0 %v588
    %v607 = vpop.xlane.xlu0 %606
    %608 = vadd.xlane.f32.xlu0 %v589
    %v609 = vpop.xlane.xlu0 %608
    %610 = vadd.xlane.f32.xlu0 %v590
    %v611 = vpop.xlane.xlu0 %610
    %612 = vadd.xlane.f32.xlu0 %v591
    %v613 = vpop.xlane.xlu0 %612
    %614 = vadd.xlane.f32.xlu0 %v592
    %v615 = vpop.xlane.xlu0 %614
    %616 = vadd.xlane.f32.xlu0 %v593
    %v617 = vpop.xlane.xlu0 %616
    %618 = vadd.xlane.f32.xlu0 %v594
    %v619 = vpop.xlane.xlu0 %618
    %620 = vadd.xlane.f32.xlu0 %v595
    %v621 = vpop.xlane.xlu0 %620
    %622 = vadd.xlane.f32.xlu0 %v596
    %v623 = vpop.xlane.xlu0 %622
    %624 = vadd.xlane.f32.xlu0 %v597
    %v625 = vpop.xlane.xlu0 %624
    %626 = vadd.xlane.f32.xlu0 %v598
    %v627 = vpop.xlane.xlu0 %626
    %628 = vadd.xlane.f32.xlu0 %v599
    %v629 = vpop.xlane.xlu0 %628
    %630 = vadd.xlane.f32.xlu0 %v600
    %v631 = vpop.xlane.xlu0 %630
    %632 = vadd.xlane.f32.xlu0 %v601
    %v633 = vpop.xlane.xlu0 %632
    %v634 = vmul.f32 %v603, 0.015625
    %v635 = vmul.f32 %v605, 0.015625
    %v636 = vmul.f32 %v607, 0.015625
    %v637 = vmul.f32 %v609, 0.015625
    %v638 = vmul.f32 %v611, 0.015625
    %v639 = vmul.f32 %v613, 0.015625
    %v640 = vmul.f32 %v615, 0.015625
    %v641 = vmul.f32 %v617, 0.015625
    %v642 = vmul.f32 %v619, 0.015625
    %v643 = vmul.f32 %v621, 0.015625
    %v644 = vmul.f32 %v623, 0.015625
    %v645 = vmul.f32 %v625, 0.015625
    %v646 = vmul.f32 %v627, 0.015625
    %v647 = vmul.f32 %v629, 0.015625
    %v648 = vmul.f32 %v631, 0.015625
    %v649 = vmul.f32 %v633, 0.015625
    %v650 = vadd.f32 %v634, 1e-05
    %v651 = vadd.f32 %v635, 1e-05
    %v652 = vadd.f32 %v636, 1e-05
    %v653 = vadd.f32 %v637, 1e-05
    %v654 = vadd.f32 %v638, 1e-05
    %v655 = vadd.f32 %v639, 1e-05
    %v656 = vadd.f32 %v640, 1e-05
    %v657 = vadd.f32 %v641, 1e-05
    %v658 = vadd.f32 %v642, 1e-05
    %v659 = vadd.f32 %v643, 1e-05
    %v660 = vadd.f32 %v644, 1e-05
    %v661 = vadd.f32 %v645, 1e-05
    %v662 = vadd.f32 %v646, 1e-05
    %v663 = vadd.f32 %v647, 1e-05
    %v664 = vadd.f32 %v648, 1e-05
    %v665 = vadd.f32 %v649, 1e-05
    %v666 = vrsqrt.pop %v650
    %v667 = vrsqrt.pop %v651
    %v668 = vrsqrt.pop %v652
    %v669 = vrsqrt.pop %v653
    %v670 = vrsqrt.pop %v654
    %v671 = vrsqrt.pop %v655
    %v672 = vrsqrt.pop %v656
    %v673 = vrsqrt.pop %v657
    %v674 = vrsqrt.pop %v658
    %v675 = vrsqrt.pop %v659
    %v676 = vrsqrt.pop %v660
    %v677 = vrsqrt.pop %v661
    %v678 = vrsqrt.pop %v662
    %v679 = vrsqrt.pop %v663
    %v680 = vrsqrt.pop %v664
    %v681 = vrsqrt.pop %v665
    %v682 = vsub.f32 %v555, %v603
    %v683 = vsub.f32 %v557, %v605
    %v684 = vsub.f32 %v559, %v607
    %v685 = vsub.f32 %v561, %v609
    %v686 = vsub.f32 %v563, %v611
    %v687 = vsub.f32 %v565, %v613
    %v688 = vsub.f32 %v567, %v615
    %v689 = vsub.f32 %v569, %v617
    %v690 = vsub.f32 %v571, %v619
    %v691 = vsub.f32 %v573, %v621
    %v692 = vsub.f32 %v575, %v623
    %v693 = vsub.f32 %v577, %v625
    %v694 = vsub.f32 %v579, %v627
    %v695 = vsub.f32 %v581, %v629
    %v696 = vsub.f32 %v583, %v631
    %v697 = vsub.f32 %v585, %v633
    %v698 = vmul.f32 %v682, 0.015625
    %v699 = vmul.f32 %v683, 0.015625
    %v700 = vmul.f32 %v684, 0.015625
    %v701 = vmul.f32 %v685, 0.015625
    %v702 = vmul.f32 %v686, 0.015625
    %v703 = vmul.f32 %v687, 0.015625
    %v704 = vmul.f32 %v688, 0.015625
    %v705 = vmul.f32 %v689, 0.015625
    %v706 = vmul.f32 %v690, 0.015625
    %v707 = vmul.f32 %v691, 0.015625
    %v708 = vmul.f32 %v692, 0.015625
    %v709 = vmul.f32 %v693, 0.015625
    %v710 = vmul.f32 %v694, 0.015625
    %v711 = vmul.f32 %v695, 0.015625
    %v712 = vmul.f32 %v696, 0.015625
    %v713 = vmul.f32 %v697, 0.015625
    %v714 = vadd.f32 %v698, 1e-05
    %v715 = vadd.f32 %v699, 1e-05
    %v716 = vadd.f32 %v700, 1e-05
    %v717 = vadd.f32 %v701, 1e-05
    %v718 = vadd.f32 %v702, 1e-05
    %v719 = vadd.f32 %v703, 1e-05
    %v720 = vadd.f32 %v704, 1e-05
    %v721 = vadd.f32 %v705, 1e-05
    %v722 = vadd.f32 %v706, 1e-05
    %v723 = vadd.f32 %v707, 1e-05
    %v724 = vadd.f32 %v708, 1e-05
    %v725 = vadd.f32 %v709, 1e-05
    %v726 = vadd.f32 %v710, 1e-05
    %v727 = vadd.f32 %v711, 1e-05
    %v728 = vadd.f32 %v712, 1e-05
    %v729 = vadd.f32 %v713, 1e-05
    %v730 = vrsqrt.pop %v714
    %v731 = vrsqrt.pop %v715
    %v732 = vrsqrt.pop %v716
    %v733 = vrsqrt.pop %v717
    %v734 = vrsqrt.pop %v718
    %v735 = vrsqrt.pop %v719
    %v736 = vrsqrt.pop %v720
    %v737 = vrsqrt.pop %v721
    %v738 = vrsqrt.pop %v722
    %v739 = vrsqrt.pop %v723
    %v740 = vrsqrt.pop %v724
    %v741 = vrsqrt.pop %v725
    %v742 = vrsqrt.pop %v726
    %v743 = vrsqrt.pop %v727
    %v744 = vrsqrt.pop %v728
    %v745 = vrsqrt.pop %v729
    %v746 = vsel %vm31, %v666, %v730
    %v747 = vsel %vm31, %v667, %v731
    %v748 = vsel %vm31, %v668, %v732
    %v749 = vsel %vm31, %v669, %v733
    %v750 = vsel %vm31, %v670, %v734
    %v751 = vsel %vm31, %v671, %v735
    %v752 = vsel %vm31, %v672, %v736
    %v753 = vsel %vm31, %v673, %v737
    %v754 = vsel %vm31, %v674, %v738
    %v755 = vsel %vm31, %v675, %v739
    %v756 = vsel %vm31, %v676, %v740
    %v757 = vsel %vm31, %v677, %v741
    %v758 = vsel %vm31, %v678, %v742
    %v759 = vsel %vm31, %v679, %v743
    %v760 = vsel %vm31, %v680, %v744
    %v761 = vsel %vm31, %v681, %v745
    %v762 = vmul.f32 %v522, %v746
    %v763 = vmul.f32 %v523, %v747
    %v764 = vmul.f32 %v524, %v748
    %v765 = vmul.f32 %v525, %v749
    %v766 = vmul.f32 %v526, %v750
    %v767 = vmul.f32 %v527, %v751
    %v768 = vmul.f32 %v528, %v752
    %v769 = vmul.f32 %v529, %v753
    %v770 = vmul.f32 %v530, %v754
    %v771 = vmul.f32 %v531, %v755
    %v772 = vmul.f32 %v532, %v756
    %v773 = vmul.f32 %v533, %v757
    %v774 = vmul.f32 %v534, %v758
    %v775 = vmul.f32 %v535, %v759
    %v776 = vmul.f32 %v536, %v760
    %v777 = vmul.f32 %v537, %v761
    %v778 = vlaneseq
    %v779 = vshrl.u32 %v778, 7
    %v780 = vsub.s32 3, %v779
    %v781 = vrot.slane %v27, %v780
    %v782 = vmul.f32 %v762, %v781
    %v783 = vmul.f32 %v763, %v781
    %v784 = vmul.f32 %v764, %v781
    %v785 = vmul.f32 %v765, %v781
    %v786 = vmul.f32 %v766, %v781
    %v787 = vmul.f32 %v767, %v781
    %v788 = vmul.f32 %v768, %v781
    %v789 = vmul.f32 %v769, %v781
    %v790 = vmul.f32 %v770, %v781
    %v791 = vmul.f32 %v771, %v781
    %v792 = vmul.f32 %v772, %v781
    %v793 = vmul.f32 %v773, %v781
    %v794 = vmul.f32 %v774, %v781
    %v795 = vmul.f32 %v775, %v781
    %v796 = vmul.f32 %v776, %v781
    %v797 = vmul.f32 %v777, %v781
    %v798 = vlaneseq
    %v799 = vshrl.u32 %v798, 7
    %v800 = vsub.s32 4, %v799
    %v801 = vrot.slane %v27, %v800
    %v802 = vadd.f32 %v782, %v801
    %v803 = vadd.f32 %v783, %v801
    %v804 = vadd.f32 %v784, %v801
    %v805 = vadd.f32 %v785, %v801
    %v806 = vadd.f32 %v786, %v801
    %v807 = vadd.f32 %v787, %v801
    %v808 = vadd.f32 %v788, %v801
    %v809 = vadd.f32 %v789, %v801
    %v810 = vadd.f32 %v790, %v801
    %v811 = vadd.f32 %v791, %v801
    %v812 = vadd.f32 %v792, %v801
    %v813 = vadd.f32 %v793, %v801
    %v814 = vadd.f32 %v794, %v801
    %v815 = vadd.f32 %v795, %v801
    %v816 = vadd.f32 %v796, %v801
    %v817 = vadd.f32 %v797, %v801
    %v818 = vmax.f32 %v802, 0.0
    %v819 = vmax.f32 %v803, 0.0
    %v820 = vmax.f32 %v804, 0.0
    %v821 = vmax.f32 %v805, 0.0
    %v822 = vmax.f32 %v806, 0.0
    %v823 = vmax.f32 %v807, 0.0
    %v824 = vmax.f32 %v808, 0.0
    %v825 = vmax.f32 %v809, 0.0
    %v826 = vmax.f32 %v810, 0.0
    %v827 = vmax.f32 %v811, 0.0
    %v828 = vmax.f32 %v812, 0.0
    %v829 = vmax.f32 %v813, 0.0
    %v830 = vmax.f32 %v814, 0.0
    %v831 = vmax.f32 %v815, 0.0
    %v832 = vmax.f32 %v816, 0.0
    %v833 = vmax.f32 %v817, 0.0
    %v834 = vpack.c.bf16 %v819, %v818
    %v835 = vpack.c.bf16 %v821, %v820
    %v836 = vpack.c.bf16 %v823, %v822
    %v837 = vpack.c.bf16 %v825, %v824
    %v838 = vpack.c.bf16 %v827, %v826
    %v839 = vpack.c.bf16 %v829, %v828
    %v840 = vpack.c.bf16 %v831, %v830
    %v841 = vpack.c.bf16 %v833, %v832
    %v842 = vld [vmem:[%s3] sm:$0xf]
    %v843 = vld [vmem:[%s3 + $0x4] sm:$0xf]
    %v844 = vld [vmem:[%s3 + $0x8] sm:$0xf]
    %v845 = vld [vmem:[%s3 + $0xc] sm:$0xf]
    %v846 = vld [vmem:[%s3 + $0x10] sm:$0xf]
    %v847 = vld [vmem:[%s3 + $0x14] sm:$0xf]
    %v848 = vld [vmem:[%s3 + $0x18] sm:$0xf]
    %v849 = vld [vmem:[%s3 + $0x1c] sm:$0xf]
    %v850 = vld [vmem:[%s3 + $0x20] sm:$0xf]
    %v851 = vld [vmem:[%s3 + $0x24] sm:$0xf]
    %v852 = vld [vmem:[%s3 + $0x28] sm:$0xf]
    %v853 = vld [vmem:[%s3 + $0x2c] sm:$0xf]
    %v854 = vld [vmem:[%s3 + $0x30] sm:$0xf]
    %v855 = vld [vmem:[%s3 + $0x34] sm:$0xf]
    %v856 = vld [vmem:[%s3 + $0x38] sm:$0xf]
    %v857 = vld [vmem:[%s3 + $0x3c] sm:$0xf]
    %v858 = vlaneseq
    %v859 = vshrl.u32 %v858, 7
    %v860 = vsub.s32 5, %v859
    %v861 = vrot.slane %v27, %v860
    %v878 = vunpack.c.l.b16 %v842
    %v879 = vunpack.c.l.b16 %v843
    %v880 = vunpack.c.l.b16 %v844
    %v881 = vunpack.c.l.b16 %v845
    %v882 = vunpack.c.l.b16 %v846
    %v883 = vunpack.c.l.b16 %v847
    %v884 = vunpack.c.l.b16 %v848
    %v885 = vunpack.c.l.b16 %v849
    %v886 = vunpack.c.l.b16 %v850
    %v887 = vunpack.c.l.b16 %v851
    %v888 = vunpack.c.l.b16 %v852
    %v889 = vunpack.c.l.b16 %v853
    %v890 = vunpack.c.l.b16 %v854
    %v891 = vunpack.c.l.b16 %v855
    %v892 = vunpack.c.l.b16 %v856
    %v893 = vunpack.c.l.b16 %v857
    %v894 = vpack.c.b16 %v879, %v878
    %v895 = vpack.c.b16 %v881, %v880
    %v896 = vpack.c.b16 %v883, %v882
    %v897 = vpack.c.b16 %v885, %v884
    %v898 = vpack.c.b16 %v887, %v886
    %v899 = vpack.c.b16 %v889, %v888
    %v900 = vpack.c.b16 %v891, %v890
    %v901 = vpack.c.b16 %v893, %v892
    %910 = vmatprep.subr.bf16.mxu0 0
    %911 = vmatpush1.bf16.msra.mxu0 %v894
    %912 = vmatprep.subr.bf16.mxu0 0
    %913 = vmatpush1.bf16.msra.mxu0 %v895
    %914 = vmatprep.subr.bf16.mxu0 0
    %915 = vmatpush1.bf16.msra.mxu0 %v896
    %916 = vmatprep.subr.bf16.mxu0 0
    %917 = vmatpush1.bf16.msra.mxu0 %v897
    %918 = vmatprep.subr.bf16.mxu0 0
    %919 = vmatpush1.bf16.msra.mxu0 %v898
    %920 = vmatprep.subr.bf16.mxu0 0
    %921 = vmatpush1.bf16.msra.mxu0 %v899
    %922 = vmatprep.subr.bf16.mxu0 0
    %923 = vmatpush1.bf16.msra.mxu0 %v900
    %924 = vmatprep.subr.bf16.mxu0 0
    %925 = vmatpush1.bf16.msra.mxu0 %v901
    %926 = vmatprep.subr.bf16.mxu0 0
    %927 = vmatpush1.bf16.msra.mxu0 0
    %928 = vmatprep.subr.bf16.mxu0 0
    %929 = vmatpush1.bf16.msra.mxu0 0
    %930 = vmatprep.subr.bf16.mxu0 0
    %931 = vmatpush1.bf16.msra.mxu0 0
    %932 = vmatprep.subr.bf16.mxu0 0
    %933 = vmatpush1.bf16.msra.mxu0 0
    %934 = vmatprep.subr.bf16.mxu0 0
    %935 = vmatpush1.bf16.msra.mxu0 0
    %936 = vmatprep.subr.bf16.mxu0 0
    %937 = vmatpush1.bf16.msra.mxu0 0
    %938 = vmatprep.subr.bf16.mxu0 0
    %939 = vmatpush1.bf16.msra.mxu0 0
    %940 = vmatprep.subr.bf16.mxu0 0
    %941 = vmatpush1.bf16.msra.mxu0 0
    %942 = vmatprep.mubr.bf16.mxu0 0
    %943 = vmatmul.mubr.bf16.gmra.mrb[0].mxu0 %v834
    %v944 = vpop.f32.mrb[0].mxu0
    %v945 = vadd.f32 %v861, %v944
    %v946 = vpop.f32.mrb[0].mxu0
    %v947 = vpop.f32.mrb[0].mxu0
    %v948 = vadd.f32 %v861, %v947
    %v949 = vpop.f32.mrb[0].mxu0
    %950 = vmatprep.mubr.bf16.mxu0 0
    %951 = vmatmul.mubr.bf16.gmra.mrb[0].mxu0 %v835
    %v952 = vpop.f32.mrb[0].mxu0
    %v953 = vadd.f32 %v861, %v952
    %v954 = vpop.f32.mrb[0].mxu0
    %v955 = vpop.f32.mrb[0].mxu0
    %v956 = vadd.f32 %v861, %v955
    %v957 = vpop.f32.mrb[0].mxu0
    %958 = vmatprep.mubr.bf16.mxu0 0
    %959 = vmatmul.mubr.bf16.gmra.mrb[0].mxu0 %v836
    %v960 = vpop.f32.mrb[0].mxu0
    %v961 = vadd.f32 %v861, %v960
    %v962 = vpop.f32.mrb[0].mxu0
    %v963 = vpop.f32.mrb[0].mxu0
    %v964 = vadd.f32 %v861, %v963
    %v965 = vpop.f32.mrb[0].mxu0
    %966 = vmatprep.mubr.bf16.mxu0 0
    %967 = vmatmul.mubr.bf16.gmra.mrb[0].mxu0 %v837
    %v968 = vpop.f32.mrb[0].mxu0
    %v969 = vadd.f32 %v861, %v968
    %v970 = vpop.f32.mrb[0].mxu0
    %v971 = vpop.f32.mrb[0].mxu0
    %v972 = vadd.f32 %v861, %v971
    %v973 = vpop.f32.mrb[0].mxu0
    %974 = vmatprep.mubr.bf16.mxu0 0
    %975 = vmatmul.mubr.bf16.gmra.mrb[0].mxu0 %v838
    %v976 = vpop.f32.mrb[0].mxu0
    %v977 = vadd.f32 %v861, %v976
    %v978 = vpop.f32.mrb[0].mxu0
    %v979 = vpop.f32.mrb[0].mxu0
    %v980 = vadd.f32 %v861, %v979
    %v981 = vpop.f32.mrb[0].mxu0
    %982 = vmatprep.mubr.bf16.mxu0 0
    %983 = vmatmul.mubr.bf16.gmra.mrb[0].mxu0 %v839
    %v984 = vpop.f32.mrb[0].mxu0
    %v985 = vadd.f32 %v861, %v984
    %v986 = vpop.f32.mrb[0].mxu0
    %v987 = vpop.f32.mrb[0].mxu0
    %v988 = vadd.f32 %v861, %v987
    %v989 = vpop.f32.mrb[0].mxu0
    %990 = vmatprep.mubr.bf16.mxu0 0
    %991 = vmatmul.mubr.bf16.gmra.mrb[0].mxu0 %v840
    %v992 = vpop.f32.mrb[0].mxu0
    %v993 = vadd.f32 %v861, %v992
    %v994 = vpop.f32.mrb[0].mxu0
    %v995 = vpop.f32.mrb[0].mxu0
    %v996 = vadd.f32 %v861, %v995
    %v997 = vpop.f32.mrb[0].mxu0
    %998 = vmatprep.mubr.bf16.mxu0 0
    %999 = vmatmul.mubr.bf16.gmra.mrb[0].mxu0 %v841
    %v1000 = vpop.f32.mrb[0].mxu0
    %v1001 = vadd.f32 %v861, %v1000
    %v1002 = vpop.f32.mrb[0].mxu0
    %v1003 = vpop.f32.mrb[0].mxu0
    %v1004 = vadd.f32 %v861, %v1003
    %v1005 = vpop.f32.mrb[0].mxu0
    %1006 = vdwg.mxu0
    %1007 = vadd.xlane.f32.xlu0 %v945
    %v1008 = vpop.xlane.xlu0 %1007
    %1009 = vadd.xlane.f32.xlu0 %v948
    %v1010 = vpop.xlane.xlu0 %1009
    %1011 = vadd.xlane.f32.xlu0 %v953
    %v1012 = vpop.xlane.xlu0 %1011
    %1013 = vadd.xlane.f32.xlu0 %v956
    %v1014 = vpop.xlane.xlu0 %1013
    %1015 = vadd.xlane.f32.xlu0 %v961
    %v1016 = vpop.xlane.xlu0 %1015
    %1017 = vadd.xlane.f32.xlu0 %v964
    %v1018 = vpop.xlane.xlu0 %1017
    %1019 = vadd.xlane.f32.xlu0 %v969
    %v1020 = vpop.xlane.xlu0 %1019
    %1021 = vadd.xlane.f32.xlu0 %v972
    %v1022 = vpop.xlane.xlu0 %1021
    %1023 = vadd.xlane.f32.xlu0 %v977
    %v1024 = vpop.xlane.xlu0 %1023
    %1025 = vadd.xlane.f32.xlu0 %v980
    %v1026 = vpop.xlane.xlu0 %1025
    %1027 = vadd.xlane.f32.xlu0 %v985
    %v1028 = vpop.xlane.xlu0 %1027
    %1029 = vadd.xlane.f32.xlu0 %v988
    %v1030 = vpop.xlane.xlu0 %1029
    %1031 = vadd.xlane.f32.xlu0 %v993
    %v1032 = vpop.xlane.xlu0 %1031
    %1033 = vadd.xlane.f32.xlu0 %v996
    %v1034 = vpop.xlane.xlu0 %1033
    %1035 = vadd.xlane.f32.xlu0 %v1001
    %v1036 = vpop.xlane.xlu0 %1035
    %1037 = vadd.xlane.f32.xlu0 %v1004
    %v1038 = vpop.xlane.xlu0 %1037
    %v1039 = vsel %vm31, %v945, 0.0
    %v1040 = vsel %vm31, %v948, 0.0
    %v1041 = vsel %vm31, %v953, 0.0
    %v1042 = vsel %vm31, %v956, 0.0
    %v1043 = vsel %vm31, %v961, 0.0
    %v1044 = vsel %vm31, %v964, 0.0
    %v1045 = vsel %vm31, %v969, 0.0
    %v1046 = vsel %vm31, %v972, 0.0
    %v1047 = vsel %vm31, %v977, 0.0
    %v1048 = vsel %vm31, %v980, 0.0
    %v1049 = vsel %vm31, %v985, 0.0
    %v1050 = vsel %vm31, %v988, 0.0
    %v1051 = vsel %vm31, %v993, 0.0
    %v1052 = vsel %vm31, %v996, 0.0
    %v1053 = vsel %vm31, %v1001, 0.0
    %v1054 = vsel %vm31, %v1004, 0.0
    %1055 = vadd.xlane.f32.xlu0 %v1039
    %v1056 = vpop.xlane.xlu0 %1055
    %1057 = vadd.xlane.f32.xlu0 %v1040
    %v1058 = vpop.xlane.xlu0 %1057
    %1059 = vadd.xlane.f32.xlu0 %v1041
    %v1060 = vpop.xlane.xlu0 %1059
    %1061 = vadd.xlane.f32.xlu0 %v1042
    %v1062 = vpop.xlane.xlu0 %1061
    %1063 = vadd.xlane.f32.xlu0 %v1043
    %v1064 = vpop.xlane.xlu0 %1063
    %1065 = vadd.xlane.f32.xlu0 %v1044
    %v1066 = vpop.xlane.xlu0 %1065
    %1067 = vadd.xlane.f32.xlu0 %v1045
    %v1068 = vpop.xlane.xlu0 %1067
    %1069 = vadd.xlane.f32.xlu0 %v1046
    %v1070 = vpop.xlane.xlu0 %1069
    %1071 = vadd.xlane.f32.xlu0 %v1047
    %v1072 = vpop.xlane.xlu0 %1071
    %1073 = vadd.xlane.f32.xlu0 %v1048
    %v1074 = vpop.xlane.xlu0 %1073
    %1075 = vadd.xlane.f32.xlu0 %v1049
    %v1076 = vpop.xlane.xlu0 %1075
    %1077 = vadd.xlane.f32.xlu0 %v1050
    %v1078 = vpop.xlane.xlu0 %1077
    %1079 = vadd.xlane.f32.xlu0 %v1051
    %v1080 = vpop.xlane.xlu0 %1079
    %1081 = vadd.xlane.f32.xlu0 %v1052
    %v1082 = vpop.xlane.xlu0 %1081
    %1083 = vadd.xlane.f32.xlu0 %v1053
    %v1084 = vpop.xlane.xlu0 %1083
    %1085 = vadd.xlane.f32.xlu0 %v1054
    %v1086 = vpop.xlane.xlu0 %1085
    %v1087 = vmul.f32 %v1056, 0.015625
    %v1088 = vmul.f32 %v1058, 0.015625
    %v1089 = vmul.f32 %v1060, 0.015625
    %v1090 = vmul.f32 %v1062, 0.015625
    %v1091 = vmul.f32 %v1064, 0.015625
    %v1092 = vmul.f32 %v1066, 0.015625
    %v1093 = vmul.f32 %v1068, 0.015625
    %v1094 = vmul.f32 %v1070, 0.015625
    %v1095 = vmul.f32 %v1072, 0.015625
    %v1096 = vmul.f32 %v1074, 0.015625
    %v1097 = vmul.f32 %v1076, 0.015625
    %v1098 = vmul.f32 %v1078, 0.015625
    %v1099 = vmul.f32 %v1080, 0.015625
    %v1100 = vmul.f32 %v1082, 0.015625
    %v1101 = vmul.f32 %v1084, 0.015625
    %v1102 = vmul.f32 %v1086, 0.015625
    %v1103 = vsub.f32 %v1008, %v1056
    %v1104 = vsub.f32 %v1010, %v1058
    %v1105 = vsub.f32 %v1012, %v1060
    %v1106 = vsub.f32 %v1014, %v1062
    %v1107 = vsub.f32 %v1016, %v1064
    %v1108 = vsub.f32 %v1018, %v1066
    %v1109 = vsub.f32 %v1020, %v1068
    %v1110 = vsub.f32 %v1022, %v1070
    %v1111 = vsub.f32 %v1024, %v1072
    %v1112 = vsub.f32 %v1026, %v1074
    %v1113 = vsub.f32 %v1028, %v1076
    %v1114 = vsub.f32 %v1030, %v1078
    %v1115 = vsub.f32 %v1032, %v1080
    %v1116 = vsub.f32 %v1034, %v1082
    %v1117 = vsub.f32 %v1036, %v1084
    %v1118 = vsub.f32 %v1038, %v1086
    %v1119 = vmul.f32 %v1103, 0.015625
    %v1120 = vmul.f32 %v1104, 0.015625
    %v1121 = vmul.f32 %v1105, 0.015625
    %v1122 = vmul.f32 %v1106, 0.015625
    %v1123 = vmul.f32 %v1107, 0.015625
    %v1124 = vmul.f32 %v1108, 0.015625
    %v1125 = vmul.f32 %v1109, 0.015625
    %v1126 = vmul.f32 %v1110, 0.015625
    %v1127 = vmul.f32 %v1111, 0.015625
    %v1128 = vmul.f32 %v1112, 0.015625
    %v1129 = vmul.f32 %v1113, 0.015625
    %v1130 = vmul.f32 %v1114, 0.015625
    %v1131 = vmul.f32 %v1115, 0.015625
    %v1132 = vmul.f32 %v1116, 0.015625
    %v1133 = vmul.f32 %v1117, 0.015625
    %v1134 = vmul.f32 %v1118, 0.015625
    %v1135 = vsel %vm31, %v1087, %v1119
    %v1136 = vsel %vm31, %v1088, %v1120
    %v1137 = vsel %vm31, %v1089, %v1121
    %v1138 = vsel %vm31, %v1090, %v1122
    %v1139 = vsel %vm31, %v1091, %v1123
    %v1140 = vsel %vm31, %v1092, %v1124
    %v1141 = vsel %vm31, %v1093, %v1125
    %v1142 = vsel %vm31, %v1094, %v1126
    %v1143 = vsel %vm31, %v1095, %v1127
    %v1144 = vsel %vm31, %v1096, %v1128
    %v1145 = vsel %vm31, %v1097, %v1129
    %v1146 = vsel %vm31, %v1098, %v1130
    %v1147 = vsel %vm31, %v1099, %v1131
    %v1148 = vsel %vm31, %v1100, %v1132
    %v1149 = vsel %vm31, %v1101, %v1133
    %v1150 = vsel %vm31, %v1102, %v1134
    %v1151 = vsub.f32 %v945, %v1135
    %v1152 = vsub.f32 %v948, %v1136
    %v1153 = vsub.f32 %v953, %v1137
    %v1154 = vsub.f32 %v956, %v1138
    %v1155 = vsub.f32 %v961, %v1139
    %v1156 = vsub.f32 %v964, %v1140
    %v1157 = vsub.f32 %v969, %v1141
    %v1158 = vsub.f32 %v972, %v1142
    %v1159 = vsub.f32 %v977, %v1143
    %v1160 = vsub.f32 %v980, %v1144
    %v1161 = vsub.f32 %v985, %v1145
    %v1162 = vsub.f32 %v988, %v1146
    %v1163 = vsub.f32 %v993, %v1147
    %v1164 = vsub.f32 %v996, %v1148
    %v1165 = vsub.f32 %v1001, %v1149
    %v1166 = vsub.f32 %v1004, %v1150
    %v1167 = vmul.f32 %v1151, %v1151
    %v1168 = vmul.f32 %v1152, %v1152
    %v1169 = vmul.f32 %v1153, %v1153
    %v1170 = vmul.f32 %v1154, %v1154
    %v1171 = vmul.f32 %v1155, %v1155
    %v1172 = vmul.f32 %v1156, %v1156
    %v1173 = vmul.f32 %v1157, %v1157
    %v1174 = vmul.f32 %v1158, %v1158
    %v1175 = vmul.f32 %v1159, %v1159
    %v1176 = vmul.f32 %v1160, %v1160
    %v1177 = vmul.f32 %v1161, %v1161
    %v1178 = vmul.f32 %v1162, %v1162
    %v1179 = vmul.f32 %v1163, %v1163
    %v1180 = vmul.f32 %v1164, %v1164
    %v1181 = vmul.f32 %v1165, %v1165
    %v1182 = vmul.f32 %v1166, %v1166
    %1183 = vadd.xlane.f32.xlu0 %v1167
    %v1184 = vpop.xlane.xlu0 %1183
    %1185 = vadd.xlane.f32.xlu0 %v1168
    %v1186 = vpop.xlane.xlu0 %1185
    %1187 = vadd.xlane.f32.xlu0 %v1169
    %v1188 = vpop.xlane.xlu0 %1187
    %1189 = vadd.xlane.f32.xlu0 %v1170
    %v1190 = vpop.xlane.xlu0 %1189
    %1191 = vadd.xlane.f32.xlu0 %v1171
    %v1192 = vpop.xlane.xlu0 %1191
    %1193 = vadd.xlane.f32.xlu0 %v1172
    %v1194 = vpop.xlane.xlu0 %1193
    %1195 = vadd.xlane.f32.xlu0 %v1173
    %v1196 = vpop.xlane.xlu0 %1195
    %1197 = vadd.xlane.f32.xlu0 %v1174
    %v1198 = vpop.xlane.xlu0 %1197
    %1199 = vadd.xlane.f32.xlu0 %v1175
    %v1200 = vpop.xlane.xlu0 %1199
    %1201 = vadd.xlane.f32.xlu0 %v1176
    %v1202 = vpop.xlane.xlu0 %1201
    %1203 = vadd.xlane.f32.xlu0 %v1177
    %v1204 = vpop.xlane.xlu0 %1203
    %1205 = vadd.xlane.f32.xlu0 %v1178
    %v1206 = vpop.xlane.xlu0 %1205
    %1207 = vadd.xlane.f32.xlu0 %v1179
    %v1208 = vpop.xlane.xlu0 %1207
    %1209 = vadd.xlane.f32.xlu0 %v1180
    %v1210 = vpop.xlane.xlu0 %1209
    %1211 = vadd.xlane.f32.xlu0 %v1181
    %v1212 = vpop.xlane.xlu0 %1211
    %1213 = vadd.xlane.f32.xlu0 %v1182
    %v1214 = vpop.xlane.xlu0 %1213
    %v1215 = vsel %vm31, %v1167, 0.0
    %v1216 = vsel %vm31, %v1168, 0.0
    %v1217 = vsel %vm31, %v1169, 0.0
    %v1218 = vsel %vm31, %v1170, 0.0
    %v1219 = vsel %vm31, %v1171, 0.0
    %v1220 = vsel %vm31, %v1172, 0.0
    %v1221 = vsel %vm31, %v1173, 0.0
    %v1222 = vsel %vm31, %v1174, 0.0
    %v1223 = vsel %vm31, %v1175, 0.0
    %v1224 = vsel %vm31, %v1176, 0.0
    %v1225 = vsel %vm31, %v1177, 0.0
    %v1226 = vsel %vm31, %v1178, 0.0
    %v1227 = vsel %vm31, %v1179, 0.0
    %v1228 = vsel %vm31, %v1180, 0.0
    %v1229 = vsel %vm31, %v1181, 0.0
    %v1230 = vsel %vm31, %v1182, 0.0
    %1231 = vadd.xlane.f32.xlu0 %v1215
    %v1232 = vpop.xlane.xlu0 %1231
    %1233 = vadd.xlane.f32.xlu0 %v1216
    %v1234 = vpop.xlane.xlu0 %1233
    %1235 = vadd.xlane.f32.xlu0 %v1217
    %v1236 = vpop.xlane.xlu0 %1235
    %1237 = vadd.xlane.f32.xlu0 %v1218
    %v1238 = vpop.xlane.xlu0 %1237
    %1239 = vadd.xlane.f32.xlu0 %v1219
    %v1240 = vpop.xlane.xlu0 %1239
    %1241 = vadd.xlane.f32.xlu0 %v1220
    %v1242 = vpop.xlane.xlu0 %1241
    %1243 = vadd.xlane.f32.xlu0 %v1221
    %v1244 = vpop.xlane.xlu0 %1243
    %1245 = vadd.xlane.f32.xlu0 %v1222
    %v1246 = vpop.xlane.xlu0 %1245
    %1247 = vadd.xlane.f32.xlu0 %v1223
    %v1248 = vpop.xlane.xlu0 %1247
    %1249 = vadd.xlane.f32.xlu0 %v1224
    %v1250 = vpop.xlane.xlu0 %1249
    %1251 = vadd.xlane.f32.xlu0 %v1225
    %v1252 = vpop.xlane.xlu0 %1251
    %1253 = vadd.xlane.f32.xlu0 %v1226
    %v1254 = vpop.xlane.xlu0 %1253
    %1255 = vadd.xlane.f32.xlu0 %v1227
    %v1256 = vpop.xlane.xlu0 %1255
    %1257 = vadd.xlane.f32.xlu0 %v1228
    %v1258 = vpop.xlane.xlu0 %1257
    %1259 = vadd.xlane.f32.xlu0 %v1229
    %v1260 = vpop.xlane.xlu0 %1259
    %1261 = vadd.xlane.f32.xlu0 %v1230
    %v1262 = vpop.xlane.xlu0 %1261
    %v1263 = vmul.f32 %v1232, 0.015625
    %v1264 = vmul.f32 %v1234, 0.015625
    %v1265 = vmul.f32 %v1236, 0.015625
    %v1266 = vmul.f32 %v1238, 0.015625
    %v1267 = vmul.f32 %v1240, 0.015625
    %v1268 = vmul.f32 %v1242, 0.015625
    %v1269 = vmul.f32 %v1244, 0.015625
    %v1270 = vmul.f32 %v1246, 0.015625
    %v1271 = vmul.f32 %v1248, 0.015625
    %v1272 = vmul.f32 %v1250, 0.015625
    %v1273 = vmul.f32 %v1252, 0.015625
    %v1274 = vmul.f32 %v1254, 0.015625
    %v1275 = vmul.f32 %v1256, 0.015625
    %v1276 = vmul.f32 %v1258, 0.015625
    %v1277 = vmul.f32 %v1260, 0.015625
    %v1278 = vmul.f32 %v1262, 0.015625
    %v1279 = vadd.f32 %v1263, 1e-05
    %v1280 = vadd.f32 %v1264, 1e-05
    %v1281 = vadd.f32 %v1265, 1e-05
    %v1282 = vadd.f32 %v1266, 1e-05
    %v1283 = vadd.f32 %v1267, 1e-05
    %v1284 = vadd.f32 %v1268, 1e-05
    %v1285 = vadd.f32 %v1269, 1e-05
    %v1286 = vadd.f32 %v1270, 1e-05
    %v1287 = vadd.f32 %v1271, 1e-05
    %v1288 = vadd.f32 %v1272, 1e-05
    %v1289 = vadd.f32 %v1273, 1e-05
    %v1290 = vadd.f32 %v1274, 1e-05
    %v1291 = vadd.f32 %v1275, 1e-05
    %v1292 = vadd.f32 %v1276, 1e-05
    %v1293 = vadd.f32 %v1277, 1e-05
    %v1294 = vadd.f32 %v1278, 1e-05
    %v1295 = vrsqrt.pop %v1279
    %v1296 = vrsqrt.pop %v1280
    %v1297 = vrsqrt.pop %v1281
    %v1298 = vrsqrt.pop %v1282
    %v1299 = vrsqrt.pop %v1283
    %v1300 = vrsqrt.pop %v1284
    %v1301 = vrsqrt.pop %v1285
    %v1302 = vrsqrt.pop %v1286
    %v1303 = vrsqrt.pop %v1287
    %v1304 = vrsqrt.pop %v1288
    %v1305 = vrsqrt.pop %v1289
    %v1306 = vrsqrt.pop %v1290
    %v1307 = vrsqrt.pop %v1291
    %v1308 = vrsqrt.pop %v1292
    %v1309 = vrsqrt.pop %v1293
    %v1310 = vrsqrt.pop %v1294
    %v1311 = vsub.f32 %v1184, %v1232
    %v1312 = vsub.f32 %v1186, %v1234
    %v1313 = vsub.f32 %v1188, %v1236
    %v1314 = vsub.f32 %v1190, %v1238
    %v1315 = vsub.f32 %v1192, %v1240
    %v1316 = vsub.f32 %v1194, %v1242
    %v1317 = vsub.f32 %v1196, %v1244
    %v1318 = vsub.f32 %v1198, %v1246
    %v1319 = vsub.f32 %v1200, %v1248
    %v1320 = vsub.f32 %v1202, %v1250
    %v1321 = vsub.f32 %v1204, %v1252
    %v1322 = vsub.f32 %v1206, %v1254
    %v1323 = vsub.f32 %v1208, %v1256
    %v1324 = vsub.f32 %v1210, %v1258
    %v1325 = vsub.f32 %v1212, %v1260
    %v1326 = vsub.f32 %v1214, %v1262
    %v1327 = vmul.f32 %v1311, 0.015625
    %v1328 = vmul.f32 %v1312, 0.015625
    %v1329 = vmul.f32 %v1313, 0.015625
    %v1330 = vmul.f32 %v1314, 0.015625
    %v1331 = vmul.f32 %v1315, 0.015625
    %v1332 = vmul.f32 %v1316, 0.015625
    %v1333 = vmul.f32 %v1317, 0.015625
    %v1334 = vmul.f32 %v1318, 0.015625
    %v1335 = vmul.f32 %v1319, 0.015625
    %v1336 = vmul.f32 %v1320, 0.015625
    %v1337 = vmul.f32 %v1321, 0.015625
    %v1338 = vmul.f32 %v1322, 0.015625
    %v1339 = vmul.f32 %v1323, 0.015625
    %v1340 = vmul.f32 %v1324, 0.015625
    %v1341 = vmul.f32 %v1325, 0.015625
    %v1342 = vmul.f32 %v1326, 0.015625
    %v1343 = vadd.f32 %v1327, 1e-05
    %v1344 = vadd.f32 %v1328, 1e-05
    %v1345 = vadd.f32 %v1329, 1e-05
    %v1346 = vadd.f32 %v1330, 1e-05
    %v1347 = vadd.f32 %v1331, 1e-05
    %v1348 = vadd.f32 %v1332, 1e-05
    %v1349 = vadd.f32 %v1333, 1e-05
    %v1350 = vadd.f32 %v1334, 1e-05
    %v1351 = vadd.f32 %v1335, 1e-05
    %v1352 = vadd.f32 %v1336, 1e-05
    %v1353 = vadd.f32 %v1337, 1e-05
    %v1354 = vadd.f32 %v1338, 1e-05
    %v1355 = vadd.f32 %v1339, 1e-05
    %v1356 = vadd.f32 %v1340, 1e-05
    %v1357 = vadd.f32 %v1341, 1e-05
    %v1358 = vadd.f32 %v1342, 1e-05
    %v1359 = vrsqrt.pop %v1343
    %v1360 = vrsqrt.pop %v1344
    %v1361 = vrsqrt.pop %v1345
    %v1362 = vrsqrt.pop %v1346
    %v1363 = vrsqrt.pop %v1347
    %v1364 = vrsqrt.pop %v1348
    %v1365 = vrsqrt.pop %v1349
    %v1366 = vrsqrt.pop %v1350
    %v1367 = vrsqrt.pop %v1351
    %v1368 = vrsqrt.pop %v1352
    %v1369 = vrsqrt.pop %v1353
    %v1370 = vrsqrt.pop %v1354
    %v1371 = vrsqrt.pop %v1355
    %v1372 = vrsqrt.pop %v1356
    %v1373 = vrsqrt.pop %v1357
    %v1374 = vrsqrt.pop %v1358
    %v1375 = vsel %vm31, %v1295, %v1359
    %v1376 = vsel %vm31, %v1296, %v1360
    %v1377 = vsel %vm31, %v1297, %v1361
    %v1378 = vsel %vm31, %v1298, %v1362
    %v1379 = vsel %vm31, %v1299, %v1363
    %v1380 = vsel %vm31, %v1300, %v1364
    %v1381 = vsel %vm31, %v1301, %v1365
    %v1382 = vsel %vm31, %v1302, %v1366
    %v1383 = vsel %vm31, %v1303, %v1367
    %v1384 = vsel %vm31, %v1304, %v1368
    %v1385 = vsel %vm31, %v1305, %v1369
    %v1386 = vsel %vm31, %v1306, %v1370
    %v1387 = vsel %vm31, %v1307, %v1371
    %v1388 = vsel %vm31, %v1308, %v1372
    %v1389 = vsel %vm31, %v1309, %v1373
    %v1390 = vsel %vm31, %v1310, %v1374
    %v1391 = vmul.f32 %v1151, %v1375
    %v1392 = vmul.f32 %v1152, %v1376
    %v1393 = vmul.f32 %v1153, %v1377
    %v1394 = vmul.f32 %v1154, %v1378
    %v1395 = vmul.f32 %v1155, %v1379
    %v1396 = vmul.f32 %v1156, %v1380
    %v1397 = vmul.f32 %v1157, %v1381
    %v1398 = vmul.f32 %v1158, %v1382
    %v1399 = vmul.f32 %v1159, %v1383
    %v1400 = vmul.f32 %v1160, %v1384
    %v1401 = vmul.f32 %v1161, %v1385
    %v1402 = vmul.f32 %v1162, %v1386
    %v1403 = vmul.f32 %v1163, %v1387
    %v1404 = vmul.f32 %v1164, %v1388
    %v1405 = vmul.f32 %v1165, %v1389
    %v1406 = vmul.f32 %v1166, %v1390
    %v1407 = vlaneseq
    %v1408 = vshrl.u32 %v1407, 7
    %v1409 = vsub.s32 6, %v1408
    %v1410 = vrot.slane %v27, %v1409
    %v1411 = vmul.f32 %v1391, %v1410
    %v1412 = vmul.f32 %v1392, %v1410
    %v1413 = vmul.f32 %v1393, %v1410
    %v1414 = vmul.f32 %v1394, %v1410
    %v1415 = vmul.f32 %v1395, %v1410
    %v1416 = vmul.f32 %v1396, %v1410
    %v1417 = vmul.f32 %v1397, %v1410
    %v1418 = vmul.f32 %v1398, %v1410
    %v1419 = vmul.f32 %v1399, %v1410
    %v1420 = vmul.f32 %v1400, %v1410
    %v1421 = vmul.f32 %v1401, %v1410
    %v1422 = vmul.f32 %v1402, %v1410
    %v1423 = vmul.f32 %v1403, %v1410
    %v1424 = vmul.f32 %v1404, %v1410
    %v1425 = vmul.f32 %v1405, %v1410
    %v1426 = vmul.f32 %v1406, %v1410
    %v1427 = vlaneseq
    %v1428 = vshrl.u32 %v1427, 7
    %v1429 = vsub.s32 7, %v1428
    %v1430 = vrot.slane %v27, %v1429
    %v1431 = vadd.f32 %v1411, %v1430
    %v1432 = vadd.f32 %v1412, %v1430
    %v1433 = vadd.f32 %v1413, %v1430
    %v1434 = vadd.f32 %v1414, %v1430
    %v1435 = vadd.f32 %v1415, %v1430
    %v1436 = vadd.f32 %v1416, %v1430
    %v1437 = vadd.f32 %v1417, %v1430
    %v1438 = vadd.f32 %v1418, %v1430
    %v1439 = vadd.f32 %v1419, %v1430
    %v1440 = vadd.f32 %v1420, %v1430
    %v1441 = vadd.f32 %v1421, %v1430
    %v1442 = vadd.f32 %v1422, %v1430
    %v1443 = vadd.f32 %v1423, %v1430
    %v1444 = vadd.f32 %v1424, %v1430
    %v1445 = vadd.f32 %v1425, %v1430
    %v1446 = vadd.f32 %v1426, %v1430
    %v1447 = vmax.f32 %v1431, 0.0
    %v1448 = vmax.f32 %v1432, 0.0
    %v1449 = vmax.f32 %v1433, 0.0
    %v1450 = vmax.f32 %v1434, 0.0
    %v1451 = vmax.f32 %v1435, 0.0
    %v1452 = vmax.f32 %v1436, 0.0
    %v1453 = vmax.f32 %v1437, 0.0
    %v1454 = vmax.f32 %v1438, 0.0
    %v1455 = vmax.f32 %v1439, 0.0
    %v1456 = vmax.f32 %v1440, 0.0
    %v1457 = vmax.f32 %v1441, 0.0
    %v1458 = vmax.f32 %v1442, 0.0
    %v1459 = vmax.f32 %v1443, 0.0
    %v1460 = vmax.f32 %v1444, 0.0
    %v1461 = vmax.f32 %v1445, 0.0
    %v1462 = vmax.f32 %v1446, 0.0
    %v1463 = vpack.c.bf16 %v1448, %v1447
    %v1464 = vpack.c.bf16 %v1450, %v1449
    %v1465 = vpack.c.bf16 %v1452, %v1451
    %v1466 = vpack.c.bf16 %v1454, %v1453
    %v1467 = vpack.c.bf16 %v1456, %v1455
    %v1468 = vpack.c.bf16 %v1458, %v1457
    %v1469 = vpack.c.bf16 %v1460, %v1459
    %v1470 = vpack.c.bf16 %v1462, %v1461
    %v1471 = vlaneseq
    %v1472 = vshrl.u32 %v1471, 7
    %v1473 = vsub.s32 0, %v1472
    %v1474 = vrot.slane %v28, %v1473
    %v1475 = vmul.f32 %v1447, %v1474
    %v1476 = vmul.f32 %v1448, %v1474
    %v1477 = vmul.f32 %v1449, %v1474
    %v1478 = vmul.f32 %v1450, %v1474
    %v1479 = vmul.f32 %v1451, %v1474
    %v1480 = vmul.f32 %v1452, %v1474
    %v1481 = vmul.f32 %v1453, %v1474
    %v1482 = vmul.f32 %v1454, %v1474
    %v1483 = vmul.f32 %v1455, %v1474
    %v1484 = vmul.f32 %v1456, %v1474
    %v1485 = vmul.f32 %v1457, %v1474
    %v1486 = vmul.f32 %v1458, %v1474
    %v1487 = vmul.f32 %v1459, %v1474
    %v1488 = vmul.f32 %v1460, %v1474
    %v1489 = vmul.f32 %v1461, %v1474
    %v1490 = vmul.f32 %v1462, %v1474
    %1491 = vadd.xlane.f32.xlu0 %v1475
    %v1492 = vpop.xlane.xlu0 %1491
    %1493 = vadd.xlane.f32.xlu0 %v1476
    %v1494 = vpop.xlane.xlu0 %1493
    %1495 = vadd.xlane.f32.xlu0 %v1477
    %v1496 = vpop.xlane.xlu0 %1495
    %1497 = vadd.xlane.f32.xlu0 %v1478
    %v1498 = vpop.xlane.xlu0 %1497
    %1499 = vadd.xlane.f32.xlu0 %v1479
    %v1500 = vpop.xlane.xlu0 %1499
    %1501 = vadd.xlane.f32.xlu0 %v1480
    %v1502 = vpop.xlane.xlu0 %1501
    %1503 = vadd.xlane.f32.xlu0 %v1481
    %v1504 = vpop.xlane.xlu0 %1503
    %1505 = vadd.xlane.f32.xlu0 %v1482
    %v1506 = vpop.xlane.xlu0 %1505
    %1507 = vadd.xlane.f32.xlu0 %v1483
    %v1508 = vpop.xlane.xlu0 %1507
    %1509 = vadd.xlane.f32.xlu0 %v1484
    %v1510 = vpop.xlane.xlu0 %1509
    %1511 = vadd.xlane.f32.xlu0 %v1485
    %v1512 = vpop.xlane.xlu0 %1511
    %1513 = vadd.xlane.f32.xlu0 %v1486
    %v1514 = vpop.xlane.xlu0 %1513
    %1515 = vadd.xlane.f32.xlu0 %v1487
    %v1516 = vpop.xlane.xlu0 %1515
    %1517 = vadd.xlane.f32.xlu0 %v1488
    %v1518 = vpop.xlane.xlu0 %1517
    %1519 = vadd.xlane.f32.xlu0 %v1489
    %v1520 = vpop.xlane.xlu0 %1519
    %1521 = vadd.xlane.f32.xlu0 %v1490
    %v1522 = vpop.xlane.xlu0 %1521
    %v1524 = vrot.slane %v28, 1
    %s1525 = vtos %v1524
    %v1526 = vstv %s1525
    %v1528 = vadd.f32 %v1492, %v1526
    %v1529 = vadd.f32 %v1494, %v1526
    %v1530 = vadd.f32 %v1496, %v1526
    %v1531 = vadd.f32 %v1498, %v1526
    %v1532 = vadd.f32 %v1500, %v1526
    %v1533 = vadd.f32 %v1502, %v1526
    %v1534 = vadd.f32 %v1504, %v1526
    %v1535 = vadd.f32 %v1506, %v1526
    %v1536 = vadd.f32 %v1508, %v1526
    %v1537 = vadd.f32 %v1510, %v1526
    %v1538 = vadd.f32 %v1512, %v1526
    %v1539 = vadd.f32 %v1514, %v1526
    %v1540 = vadd.f32 %v1516, %v1526
    %v1541 = vadd.f32 %v1518, %v1526
    %v1542 = vadd.f32 %v1520, %v1526
    %v1543 = vadd.f32 %v1522, %v1526
    %v1560 = vlaneseq
    %v1561 = vshrl.u32 %v1560, 7
    %v1562 = vsub.s32 %v30, %v1561
    %v1563 = vrot.slane %v1528, %v1562
    %v1564 = vadd.s32 %v30, 4294967288
    %v1565 = vlaneseq
    %v1566 = vshrl.u32 %v1565, 7
    %v1567 = vsub.s32 %v1564, %v1566
    %v1568 = vrot.slane %v1529, %v1567
    %vm1569 = vcmask 130112
    %v1570 = vsel %vm1569, %v1568, %v1563
    %v1571 = vadd.s32 %v30, 4294967280
    %v1572 = vlaneseq
    %v1573 = vshrl.u32 %v1572, 7
    %v1574 = vsub.s32 %v1571, %v1573
    %v1575 = vrot.slane %v1530, %v1574
    %vm1576 = vcmask 195712
    %v1577 = vsel %vm1576, %v1575, %v1570
    %v1578 = vadd.s32 %v30, 4294967272
    %v1579 = vlaneseq
    %v1580 = vshrl.u32 %v1579, 7
    %v1581 = vsub.s32 %v1578, %v1580
    %v1582 = vrot.slane %v1531, %v1581
    %vm1583 = vcmask 261312
    %v1584 = vsel %vm1583, %v1582, %v1577
    %v1585 = vadd.s32 %v30, 4294967264
    %v1586 = vlaneseq
    %v1587 = vshrl.u32 %v1586, 7
    %v1588 = vsub.s32 %v1585, %v1587
    %v1589 = vrot.slane %v1532, %v1588
    %vm1590 = vcmask 326912
    %v1591 = vsel %vm1590, %v1589, %v1584
    %v1592 = vadd.s32 %v30, 4294967256
    %v1593 = vlaneseq
    %v1594 = vshrl.u32 %v1593, 7
    %v1595 = vsub.s32 %v1592, %v1594
    %v1596 = vrot.slane %v1533, %v1595
    %vm1597 = vcmask 392512
    %v1598 = vsel %vm1597, %v1596, %v1591
    %v1599 = vadd.s32 %v30, 4294967248
    %v1600 = vlaneseq
    %v1601 = vshrl.u32 %v1600, 7
    %v1602 = vsub.s32 %v1599, %v1601
    %v1603 = vrot.slane %v1534, %v1602
    %vm1604 = vcmask 458112
    %v1605 = vsel %vm1604, %v1603, %v1598
    %v1606 = vadd.s32 %v30, 4294967240
    %v1607 = vlaneseq
    %v1608 = vshrl.u32 %v1607, 7
    %v1609 = vsub.s32 %v1606, %v1608
    %v1610 = vrot.slane %v1535, %v1609
    %vm1611 = vcmask 523712
    %v1612 = vsel %vm1611, %v1610, %v1605
    %v1613 = vlaneseq
    %v1614 = vshrl.u32 %v1613, 7
    %v1615 = vsub.s32 %v30, %v1614
    %v1616 = vrot.slane %v1536, %v1615
    %v1617 = vlaneseq
    %v1618 = vshrl.u32 %v1617, 7
    %v1619 = vsub.s32 %v1564, %v1618
    %v1620 = vrot.slane %v1537, %v1619
    %v1621 = vsel %vm1569, %v1620, %v1616
    %v1622 = vlaneseq
    %v1623 = vshrl.u32 %v1622, 7
    %v1624 = vsub.s32 %v1571, %v1623
    %v1625 = vrot.slane %v1538, %v1624
    %v1626 = vsel %vm1576, %v1625, %v1621
    %v1627 = vlaneseq
    %v1628 = vshrl.u32 %v1627, 7
    %v1629 = vsub.s32 %v1578, %v1628
    %v1630 = vrot.slane %v1539, %v1629
    %v1631 = vsel %vm1583, %v1630, %v1626
    %v1632 = vlaneseq
    %v1633 = vshrl.u32 %v1632, 7
    %v1634 = vsub.s32 %v1585, %v1633
    %v1635 = vrot.slane %v1540, %v1634
    %v1636 = vsel %vm1590, %v1635, %v1631
    %v1637 = vlaneseq
    %v1638 = vshrl.u32 %v1637, 7
    %v1639 = vsub.s32 %v1592, %v1638
    %v1640 = vrot.slane %v1541, %v1639
    %v1641 = vsel %vm1597, %v1640, %v1636
    %v1642 = vlaneseq
    %v1643 = vshrl.u32 %v1642, 7
    %v1644 = vsub.s32 %v1599, %v1643
    %v1645 = vrot.slane %v1542, %v1644
    %v1646 = vsel %vm1604, %v1645, %v1641
    %v1647 = vlaneseq
    %v1648 = vshrl.u32 %v1647, 7
    %v1649 = vsub.s32 %v1606, %v1648
    %v1650 = vrot.slane %v1543, %v1649
    %v1651 = vsel %vm1611, %v1650, %v1646
    %vm1652 = vcmask 1041409
    %v1653 = vsel %vm1652, %v1651, %v1612
    %vm1655 = vcmask 517120
    %v1656 = vsel %vm1655, %v1653, -inf
    %1657 = vmax.xlane.f32.xlu0 %v1656
    %v1658 = vpop.xlane.xlu0 %1657
    %v1660 = vlaneseq
    %v1661 = vshrl.u32 %v1660, 7
    %v1662 = vsub.s32 0, %v1661
    %v1663 = vrot.slane %v1658, %v1662
    %v1664 = vlaneseq
    %v1665 = vshrl.u32 %v1664, 7
    %v1666 = vsub.s32 1, %v1665
    %v1667 = vrot.slane %v1658, %v1666
    %v1670 = vsub.f32 %v1528, %v1663
    %v1671 = vsub.f32 %v1529, %v1663
    %v1672 = vsub.f32 %v1530, %v1663
    %v1673 = vsub.f32 %v1531, %v1663
    %v1674 = vsub.f32 %v1532, %v1663
    %v1675 = vsub.f32 %v1533, %v1663
    %v1676 = vsub.f32 %v1534, %v1663
    %v1677 = vsub.f32 %v1535, %v1663
    %v1678 = vsub.f32 %v1536, %v1667
    %v1679 = vsub.f32 %v1537, %v1667
    %v1680 = vsub.f32 %v1538, %v1667
    %v1681 = vsub.f32 %v1539, %v1667
    %v1682 = vsub.f32 %v1540, %v1667
    %v1683 = vsub.f32 %v1541, %v1667
    %v1684 = vsub.f32 %v1542, %v1667
    %v1685 = vsub.f32 %v1543, %v1667
    %v1686 = vmul.f32 %v1670, 1.442695
    %v1687 = vpow.pop %v1686
    %v1688 = vmul.f32 %v1671, 1.442695
    %v1689 = vpow.pop %v1688
    %v1690 = vmul.f32 %v1672, 1.442695
    %v1691 = vpow.pop %v1690
    %v1692 = vmul.f32 %v1673, 1.442695
    %v1693 = vpow.pop %v1692
    %v1694 = vmul.f32 %v1674, 1.442695
    %v1695 = vpow.pop %v1694
    %v1696 = vmul.f32 %v1675, 1.442695
    %v1697 = vpow.pop %v1696
    %v1698 = vmul.f32 %v1676, 1.442695
    %v1699 = vpow.pop %v1698
    %v1700 = vmul.f32 %v1677, 1.442695
    %v1701 = vpow.pop %v1700
    %v1702 = vmul.f32 %v1678, 1.442695
    %v1703 = vpow.pop %v1702
    %v1704 = vmul.f32 %v1679, 1.442695
    %v1705 = vpow.pop %v1704
    %v1706 = vmul.f32 %v1680, 1.442695
    %v1707 = vpow.pop %v1706
    %v1708 = vmul.f32 %v1681, 1.442695
    %v1709 = vpow.pop %v1708
    %v1710 = vmul.f32 %v1682, 1.442695
    %v1711 = vpow.pop %v1710
    %v1712 = vmul.f32 %v1683, 1.442695
    %v1713 = vpow.pop %v1712
    %v1714 = vmul.f32 %v1684, 1.442695
    %v1715 = vpow.pop %v1714
    %v1716 = vmul.f32 %v1685, 1.442695
    %v1717 = vpow.pop %v1716
    %1734 = vset.pattern.permute.xlu0 0
    %1735 = vperm.xlu0 %1734, %v1687
    %v1736 = vpop.permute.xlu0 %1735
    %1737 = vset.pattern.permute.xlu0 0
    %1738 = vperm.xlu0 %1737, %v1689
    %v1739 = vpop.permute.xlu0 %1738
    %1740 = vset.pattern.permute.xlu0 0
    %1741 = vperm.xlu0 %1740, %v1691
    %v1742 = vpop.permute.xlu0 %1741
    %1743 = vset.pattern.permute.xlu0 0
    %1744 = vperm.xlu0 %1743, %v1693
    %v1745 = vpop.permute.xlu0 %1744
    %1746 = vset.pattern.permute.xlu0 0
    %1747 = vperm.xlu0 %1746, %v1695
    %v1748 = vpop.permute.xlu0 %1747
    %1749 = vset.pattern.permute.xlu0 0
    %1750 = vperm.xlu0 %1749, %v1697
    %v1751 = vpop.permute.xlu0 %1750
    %1752 = vset.pattern.permute.xlu0 0
    %1753 = vperm.xlu0 %1752, %v1699
    %v1754 = vpop.permute.xlu0 %1753
    %1755 = vset.pattern.permute.xlu0 0
    %1756 = vperm.xlu0 %1755, %v1701
    %v1757 = vpop.permute.xlu0 %1756
    %1758 = vset.pattern.permute.xlu0 0
    %1759 = vperm.xlu0 %1758, %v1703
    %v1760 = vpop.permute.xlu0 %1759
    %1761 = vset.pattern.permute.xlu0 0
    %1762 = vperm.xlu0 %1761, %v1705
    %v1763 = vpop.permute.xlu0 %1762
    %1764 = vset.pattern.permute.xlu0 0
    %1765 = vperm.xlu0 %1764, %v1707
    %v1766 = vpop.permute.xlu0 %1765
    %1767 = vset.pattern.permute.xlu0 0
    %1768 = vperm.xlu0 %1767, %v1709
    %v1769 = vpop.permute.xlu0 %1768
    %1770 = vset.pattern.permute.xlu0 0
    %1771 = vperm.xlu0 %1770, %v1711
    %v1772 = vpop.permute.xlu0 %1771
    %1773 = vset.pattern.permute.xlu0 0
    %1774 = vperm.xlu0 %1773, %v1713
    %v1775 = vpop.permute.xlu0 %1774
    %1776 = vset.pattern.permute.xlu0 0
    %1777 = vperm.xlu0 %1776, %v1715
    %v1778 = vpop.permute.xlu0 %1777
    %1779 = vset.pattern.permute.xlu0 0
    %1780 = vperm.xlu0 %1779, %v1717
    %v1781 = vpop.permute.xlu0 %1780
    %v1782 = vlaneseq
    %v1783 = vshrl.u32 %v1782, 7
    %v1784 = vsub.s32 %v30, %v1783
    %v1785 = vrot.slane %v1736, %v1784
    %v1786 = vlaneseq
    %v1787 = vshrl.u32 %v1786, 7
    %v1788 = vsub.s32 %v1564, %v1787
    %v1789 = vrot.slane %v1739, %v1788
    %v1790 = vsel %vm1569, %v1789, %v1785
    %v1791 = vlaneseq
    %v1792 = vshrl.u32 %v1791, 7
    %v1793 = vsub.s32 %v1571, %v1792
    %v1794 = vrot.slane %v1742, %v1793
    %v1795 = vsel %vm1576, %v1794, %v1790
    %v1796 = vlaneseq
    %v1797 = vshrl.u32 %v1796, 7
    %v1798 = vsub.s32 %v1578, %v1797
    %v1799 = vrot.slane %v1745, %v1798
    %v1800 = vsel %vm1583, %v1799, %v1795
    %v1801 = vlaneseq
    %v1802 = vshrl.u32 %v1801, 7
    %v1803 = vsub.s32 %v1585, %v1802
    %v1804 = vrot.slane %v1748, %v1803
    %v1805 = vsel %vm1590, %v1804, %v1800
    %v1806 = vlaneseq
    %v1807 = vshrl.u32 %v1806, 7
    %v1808 = vsub.s32 %v1592, %v1807
    %v1809 = vrot.slane %v1751, %v1808
    %v1810 = vsel %vm1597, %v1809, %v1805
    %v1811 = vlaneseq
    %v1812 = vshrl.u32 %v1811, 7
    %v1813 = vsub.s32 %v1599, %v1812
    %v1814 = vrot.slane %v1754, %v1813
    %v1815 = vsel %vm1604, %v1814, %v1810
    %v1816 = vlaneseq
    %v1817 = vshrl.u32 %v1816, 7
    %v1818 = vsub.s32 %v1606, %v1817
    %v1819 = vrot.slane %v1757, %v1818
    %v1820 = vsel %vm1611, %v1819, %v1815
    %v1821 = vlaneseq
    %v1822 = vshrl.u32 %v1821, 7
    %v1823 = vsub.s32 %v30, %v1822
    %v1824 = vrot.slane %v1760, %v1823
    %v1825 = vlaneseq
    %v1826 = vshrl.u32 %v1825, 7
    %v1827 = vsub.s32 %v1564, %v1826
    %v1828 = vrot.slane %v1763, %v1827
    %v1829 = vsel %vm1569, %v1828, %v1824
    %v1830 = vlaneseq
    %v1831 = vshrl.u32 %v1830, 7
    %v1832 = vsub.s32 %v1571, %v1831
    %v1833 = vrot.slane %v1766, %v1832
    %v1834 = vsel %vm1576, %v1833, %v1829
    %v1835 = vlaneseq
    %v1836 = vshrl.u32 %v1835, 7
    %v1837 = vsub.s32 %v1578, %v1836
    %v1838 = vrot.slane %v1769, %v1837
    %v1839 = vsel %vm1583, %v1838, %v1834
    %v1840 = vlaneseq
    %v1841 = vshrl.u32 %v1840, 7
    %v1842 = vsub.s32 %v1585, %v1841
    %v1843 = vrot.slane %v1772, %v1842
    %v1844 = vsel %vm1590, %v1843, %v1839
    %v1845 = vlaneseq
    %v1846 = vshrl.u32 %v1845, 7
    %v1847 = vsub.s32 %v1592, %v1846
    %v1848 = vrot.slane %v1775, %v1847
    %v1849 = vsel %vm1597, %v1848, %v1844
    %v1850 = vlaneseq
    %v1851 = vshrl.u32 %v1850, 7
    %v1852 = vsub.s32 %v1599, %v1851
    %v1853 = vrot.slane %v1778, %v1852
    %v1854 = vsel %vm1604, %v1853, %v1849
    %v1855 = vlaneseq
    %v1856 = vshrl.u32 %v1855, 7
    %v1857 = vsub.s32 %v1606, %v1856
    %v1858 = vrot.slane %v1781, %v1857
    %v1859 = vsel %vm1611, %v1858, %v1854
    %v1860 = vsel %vm1652, %v1859, %v1820
    %v1862 = vsel %vm1655, %v1860, 0.0
    %1863 = vadd.xlane.f32.xlu0 %v1862
    %v1864 = vpop.xlane.xlu0 %1863
    %v1865 = vrcp.pop %v1864
    %v1867 = vlaneseq
    %v1868 = vshrl.u32 %v1867, 7
    %v1869 = vsub.s32 0, %v1868
    %v1870 = vrot.slane %v1865, %v1869
    %v1871 = vlaneseq
    %v1872 = vshrl.u32 %v1871, 7
    %v1873 = vsub.s32 1, %v1872
    %v1874 = vrot.slane %v1865, %v1873
    %v1877 = vmul.f32 %v1687, %v1870
    %v1878 = vmul.f32 %v1689, %v1870
    %v1879 = vmul.f32 %v1691, %v1870
    %v1880 = vmul.f32 %v1693, %v1870
    %v1881 = vmul.f32 %v1695, %v1870
    %v1882 = vmul.f32 %v1697, %v1870
    %v1883 = vmul.f32 %v1699, %v1870
    %v1884 = vmul.f32 %v1701, %v1870
    %v1885 = vmul.f32 %v1703, %v1874
    %v1886 = vmul.f32 %v1705, %v1874
    %v1887 = vmul.f32 %v1707, %v1874
    %v1888 = vmul.f32 %v1709, %v1874
    %v1889 = vmul.f32 %v1711, %v1874
    %v1890 = vmul.f32 %v1713, %v1874
    %v1891 = vmul.f32 %v1715, %v1874
    %v1892 = vmul.f32 %v1717, %v1874
    %1909 = vset.pattern.permute.xlu0 0
    %1910 = vperm.xlu0 %1909, %v1877
    %v1911 = vpop.permute.xlu0 %1910
    %1912 = vset.pattern.permute.xlu0 0
    %1913 = vperm.xlu0 %1912, %v1878
    %v1914 = vpop.permute.xlu0 %1913
    %1915 = vset.pattern.permute.xlu0 0
    %1916 = vperm.xlu0 %1915, %v1879
    %v1917 = vpop.permute.xlu0 %1916
    %1918 = vset.pattern.permute.xlu0 0
    %1919 = vperm.xlu0 %1918, %v1880
    %v1920 = vpop.permute.xlu0 %1919
    %1921 = vset.pattern.permute.xlu0 0
    %1922 = vperm.xlu0 %1921, %v1881
    %v1923 = vpop.permute.xlu0 %1922
    %1924 = vset.pattern.permute.xlu0 0
    %1925 = vperm.xlu0 %1924, %v1882
    %v1926 = vpop.permute.xlu0 %1925
    %1927 = vset.pattern.permute.xlu0 0
    %1928 = vperm.xlu0 %1927, %v1883
    %v1929 = vpop.permute.xlu0 %1928
    %1930 = vset.pattern.permute.xlu0 0
    %1931 = vperm.xlu0 %1930, %v1884
    %v1932 = vpop.permute.xlu0 %1931
    %1933 = vset.pattern.permute.xlu0 0
    %1934 = vperm.xlu0 %1933, %v1885
    %v1935 = vpop.permute.xlu0 %1934
    %1936 = vset.pattern.permute.xlu0 0
    %1937 = vperm.xlu0 %1936, %v1886
    %v1938 = vpop.permute.xlu0 %1937
    %1939 = vset.pattern.permute.xlu0 0
    %1940 = vperm.xlu0 %1939, %v1887
    %v1941 = vpop.permute.xlu0 %1940
    %1942 = vset.pattern.permute.xlu0 0
    %1943 = vperm.xlu0 %1942, %v1888
    %v1944 = vpop.permute.xlu0 %1943
    %1945 = vset.pattern.permute.xlu0 0
    %1946 = vperm.xlu0 %1945, %v1889
    %v1947 = vpop.permute.xlu0 %1946
    %1948 = vset.pattern.permute.xlu0 0
    %1949 = vperm.xlu0 %1948, %v1890
    %v1950 = vpop.permute.xlu0 %1949
    %1951 = vset.pattern.permute.xlu0 0
    %1952 = vperm.xlu0 %1951, %v1891
    %v1953 = vpop.permute.xlu0 %1952
    %1954 = vset.pattern.permute.xlu0 0
    %1955 = vperm.xlu0 %1954, %v1892
    %v1956 = vpop.permute.xlu0 %1955
    %v1957 = vlaneseq
    %v1958 = vshrl.u32 %v1957, 7
    %v1959 = vsub.s32 %v30, %v1958
    %v1960 = vrot.slane %v1911, %v1959
    %v1961 = vlaneseq
    %v1962 = vshrl.u32 %v1961, 7
    %v1963 = vsub.s32 %v1564, %v1962
    %v1964 = vrot.slane %v1914, %v1963
    %v1965 = vsel %vm1569, %v1964, %v1960
    %v1966 = vlaneseq
    %v1967 = vshrl.u32 %v1966, 7
    %v1968 = vsub.s32 %v1571, %v1967
    %v1969 = vrot.slane %v1917, %v1968
    %v1970 = vsel %vm1576, %v1969, %v1965
    %v1971 = vlaneseq
    %v1972 = vshrl.u32 %v1971, 7
    %v1973 = vsub.s32 %v1578, %v1972
    %v1974 = vrot.slane %v1920, %v1973
    %v1975 = vsel %vm1583, %v1974, %v1970
    %v1976 = vlaneseq
    %v1977 = vshrl.u32 %v1976, 7
    %v1978 = vsub.s32 %v1585, %v1977
    %v1979 = vrot.slane %v1923, %v1978
    %v1980 = vsel %vm1590, %v1979, %v1975
    %v1981 = vlaneseq
    %v1982 = vshrl.u32 %v1981, 7
    %v1983 = vsub.s32 %v1592, %v1982
    %v1984 = vrot.slane %v1926, %v1983
    %v1985 = vsel %vm1597, %v1984, %v1980
    %v1986 = vlaneseq
    %v1987 = vshrl.u32 %v1986, 7
    %v1988 = vsub.s32 %v1599, %v1987
    %v1989 = vrot.slane %v1929, %v1988
    %v1990 = vsel %vm1604, %v1989, %v1985
    %v1991 = vlaneseq
    %v1992 = vshrl.u32 %v1991, 7
    %v1993 = vsub.s32 %v1606, %v1992
    %v1994 = vrot.slane %v1932, %v1993
    %v1995 = vsel %vm1611, %v1994, %v1990
    %v1996 = vlaneseq
    %v1997 = vshrl.u32 %v1996, 7
    %v1998 = vsub.s32 %v30, %v1997
    %v1999 = vrot.slane %v1935, %v1998
    %v2000 = vlaneseq
    %v2001 = vshrl.u32 %v2000, 7
    %v2002 = vsub.s32 %v1564, %v2001
    %v2003 = vrot.slane %v1938, %v2002
    %v2004 = vsel %vm1569, %v2003, %v1999
    %v2005 = vlaneseq
    %v2006 = vshrl.u32 %v2005, 7
    %v2007 = vsub.s32 %v1571, %v2006
    %v2008 = vrot.slane %v1941, %v2007
    %v2009 = vsel %vm1576, %v2008, %v2004
    %v2010 = vlaneseq
    %v2011 = vshrl.u32 %v2010, 7
    %v2012 = vsub.s32 %v1578, %v2011
    %v2013 = vrot.slane %v1944, %v2012
    %v2014 = vsel %vm1583, %v2013, %v2009
    %v2015 = vlaneseq
    %v2016 = vshrl.u32 %v2015, 7
    %v2017 = vsub.s32 %v1585, %v2016
    %v2018 = vrot.slane %v1947, %v2017
    %v2019 = vsel %vm1590, %v2018, %v2014
    %v2020 = vlaneseq
    %v2021 = vshrl.u32 %v2020, 7
    %v2022 = vsub.s32 %v1592, %v2021
    %v2023 = vrot.slane %v1950, %v2022
    %v2024 = vsel %vm1597, %v2023, %v2019
    %v2025 = vlaneseq
    %v2026 = vshrl.u32 %v2025, 7
    %v2027 = vsub.s32 %v1599, %v2026
    %v2028 = vrot.slane %v1953, %v2027
    %v2029 = vsel %vm1604, %v2028, %v2024
    %v2030 = vlaneseq
    %v2031 = vshrl.u32 %v2030, 7
    %v2032 = vsub.s32 %v1606, %v2031
    %v2033 = vrot.slane %v1956, %v2032
    %v2034 = vsel %vm1611, %v2033, %v2029
    %v2035 = vsel %vm1652, %v2034, %v1995
    %2037 = vst.msk [vmem:[#allocation2] sm:$0x3] %vm1655, %v2035
    %v2038 = vld [vmem:[%s4] sm:$0xf]
    %v2039 = vld [vmem:[%s4 + $0x4] sm:$0xf]
    %v2040 = vld [vmem:[%s4 + $0x8] sm:$0xf]
    %v2041 = vld [vmem:[%s4 + $0xc] sm:$0xf]
    %v2042 = vld [vmem:[%s4 + $0x10] sm:$0xf]
    %v2043 = vld [vmem:[%s4 + $0x14] sm:$0xf]
    %v2044 = vld [vmem:[%s4 + $0x18] sm:$0xf]
    %v2045 = vld [vmem:[%s4 + $0x1c] sm:$0xf]
    %v2046 = vld [vmem:[%s4 + $0x20] sm:$0xf]
    %v2047 = vld [vmem:[%s4 + $0x24] sm:$0xf]
    %v2048 = vld [vmem:[%s4 + $0x28] sm:$0xf]
    %v2049 = vld [vmem:[%s4 + $0x2c] sm:$0xf]
    %v2050 = vld [vmem:[%s4 + $0x30] sm:$0xf]
    %v2051 = vld [vmem:[%s4 + $0x34] sm:$0xf]
    %v2052 = vld [vmem:[%s4 + $0x38] sm:$0xf]
    %v2053 = vld [vmem:[%s4 + $0x3c] sm:$0xf]
    %v2054 = vlaneseq
    %v2055 = vshrl.u32 %v2054, 7
    %v2056 = vsub.s32 1, %v2055
    %v2057 = vrot.slane %v28, %v2056
    %v2074 = vunpack.c.l.b16 %v2038
    %v2075 = vunpack.c.l.b16 %v2039
    %v2076 = vunpack.c.l.b16 %v2040
    %v2077 = vunpack.c.l.b16 %v2041
    %v2078 = vunpack.c.l.b16 %v2042
    %v2079 = vunpack.c.l.b16 %v2043
    %v2080 = vunpack.c.l.b16 %v2044
    %v2081 = vunpack.c.l.b16 %v2045
    %v2082 = vunpack.c.l.b16 %v2046
    %v2083 = vunpack.c.l.b16 %v2047
    %v2084 = vunpack.c.l.b16 %v2048
    %v2085 = vunpack.c.l.b16 %v2049
    %v2086 = vunpack.c.l.b16 %v2050
    %v2087 = vunpack.c.l.b16 %v2051
    %v2088 = vunpack.c.l.b16 %v2052
    %v2089 = vunpack.c.l.b16 %v2053
    %v2090 = vpack.c.b16 %v2075, %v2074
    %v2091 = vpack.c.b16 %v2077, %v2076
    %v2092 = vpack.c.b16 %v2079, %v2078
    %v2093 = vpack.c.b16 %v2081, %v2080
    %v2094 = vpack.c.b16 %v2083, %v2082
    %v2095 = vpack.c.b16 %v2085, %v2084
    %v2096 = vpack.c.b16 %v2087, %v2086
    %v2097 = vpack.c.b16 %v2089, %v2088
    %2107 = vrot.lane.b32.xlu0 %v2057, 127
    %v2108 = vpop.permute.xlu0 %2107
    %2110 = vmatprep.subr.bf16.mxu0 0
    %2111 = vmatpush1.bf16.msra.mxu0 %v2090
    %2112 = vmatprep.subr.bf16.mxu0 0
    %2113 = vmatpush1.bf16.msra.mxu0 %v2091
    %2114 = vmatprep.subr.bf16.mxu0 0
    %2115 = vmatpush1.bf16.msra.mxu0 %v2092
    %2116 = vmatprep.subr.bf16.mxu0 0
    %2117 = vmatpush1.bf16.msra.mxu0 %v2093
    %2118 = vmatprep.subr.bf16.mxu0 0
    %2119 = vmatpush1.bf16.msra.mxu0 %v2094
    %2120 = vmatprep.subr.bf16.mxu0 0
    %2121 = vmatpush1.bf16.msra.mxu0 %v2095
    %2122 = vmatprep.subr.bf16.mxu0 0
    %2123 = vmatpush1.bf16.msra.mxu0 %v2096
    %2124 = vmatprep.subr.bf16.mxu0 0
    %2125 = vmatpush1.bf16.msra.mxu0 %v2097
    %2126 = vmatprep.subr.bf16.mxu0 0
    %2127 = vmatpush1.bf16.msra.mxu0 0
    %2128 = vmatprep.subr.bf16.mxu0 0
    %2129 = vmatpush1.bf16.msra.mxu0 0
    %2130 = vmatprep.subr.bf16.mxu0 0
    %2131 = vmatpush1.bf16.msra.mxu0 0
    %2132 = vmatprep.subr.bf16.mxu0 0
    %2133 = vmatpush1.bf16.msra.mxu0 0
    %2134 = vmatprep.subr.bf16.mxu0 0
    %2135 = vmatpush1.bf16.msra.mxu0 0
    %2136 = vmatprep.subr.bf16.mxu0 0
    %2137 = vmatpush1.bf16.msra.mxu0 0
    %2138 = vmatprep.subr.bf16.mxu0 0
    %2139 = vmatpush1.bf16.msra.mxu0 0
    %2140 = vmatprep.subr.bf16.mxu0 0
    %2141 = vmatpush1.bf16.msra.mxu0 0
    %2142 = vmatprep.mubr.bf16.mxu0 0
    %2143 = vmatmul.mubr.bf16.gmra.mrb[0].mxu0 %v1463
    %v2144 = vpop.f32.mrb[0].mxu0
    %v2145 = vadd.f32 %v2108, %v2144
    %v2146 = vpop.f32.mrb[0].mxu0
    %v2147 = vpop.f32.mrb[0].mxu0
    %v2148 = vadd.f32 %v2108, %v2147
    %v2149 = vpop.f32.mrb[0].mxu0
    %2150 = vmatprep.mubr.bf16.mxu0 0
    %2151 = vmatmul.mubr.bf16.gmra.mrb[0].mxu0 %v1464
    %v2152 = vpop.f32.mrb[0].mxu0
    %v2153 = vadd.f32 %v2108, %v2152
    %v2154 = vpop.f32.mrb[0].mxu0
    %v2155 = vpop.f32.mrb[0].mxu0
    %v2156 = vadd.f32 %v2108, %v2155
    %v2157 = vpop.f32.mrb[0].mxu0
    %2158 = vmatprep.mubr.bf16.mxu0 0
    %2159 = vmatmul.mubr.bf16.gmra.mrb[0].mxu0 %v1465
    %v2160 = vpop.f32.mrb[0].mxu0
    %v2161 = vadd.f32 %v2108, %v2160
    %v2162 = vpop.f32.mrb[0].mxu0
    %v2163 = vpop.f32.mrb[0].mxu0
    %v2164 = vadd.f32 %v2108, %v2163
    %v2165 = vpop.f32.mrb[0].mxu0
    %2166 = vmatprep.mubr.bf16.mxu0 0
    %2167 = vmatmul.mubr.bf16.gmra.mrb[0].mxu0 %v1466
    %v2168 = vpop.f32.mrb[0].mxu0
    %v2169 = vadd.f32 %v2108, %v2168
    %v2170 = vpop.f32.mrb[0].mxu0
    %v2171 = vpop.f32.mrb[0].mxu0
    %v2172 = vadd.f32 %v2108, %v2171
    %v2173 = vpop.f32.mrb[0].mxu0
    %2174 = vmatprep.mubr.bf16.mxu0 0
    %2175 = vmatmul.mubr.bf16.gmra.mrb[0].mxu0 %v1467
    %v2176 = vpop.f32.mrb[0].mxu0
    %v2177 = vadd.f32 %v2108, %v2176
    %v2178 = vpop.f32.mrb[0].mxu0
    %v2179 = vpop.f32.mrb[0].mxu0
    %v2180 = vadd.f32 %v2108, %v2179
    %v2181 = vpop.f32.mrb[0].mxu0
    %2182 = vmatprep.mubr.bf16.mxu0 0
    %2183 = vmatmul.mubr.bf16.gmra.mrb[0].mxu0 %v1468
    %v2184 = vpop.f32.mrb[0].mxu0
    %v2185 = vadd.f32 %v2108, %v2184
    %v2186 = vpop.f32.mrb[0].mxu0
    %v2187 = vpop.f32.mrb[0].mxu0
    %v2188 = vadd.f32 %v2108, %v2187
    %v2189 = vpop.f32.mrb[0].mxu0
    %2190 = vmatprep.mubr.bf16.mxu0 0
    %2191 = vmatmul.mubr.bf16.gmra.mrb[0].mxu0 %v1469
    %v2192 = vpop.f32.mrb[0].mxu0
    %v2193 = vadd.f32 %v2108, %v2192
    %v2194 = vpop.f32.mrb[0].mxu0
    %v2195 = vpop.f32.mrb[0].mxu0
    %v2196 = vadd.f32 %v2108, %v2195
    %v2197 = vpop.f32.mrb[0].mxu0
    %2198 = vmatprep.mubr.bf16.mxu0 0
    %2199 = vmatmul.mubr.bf16.gmra.mrb[0].mxu0 %v1470
    %v2200 = vpop.f32.mrb[0].mxu0
    %v2201 = vadd.f32 %v2108, %v2200
    %v2202 = vpop.f32.mrb[0].mxu0
    %v2203 = vpop.f32.mrb[0].mxu0
    %v2204 = vadd.f32 %v2108, %v2203
    %v2205 = vpop.f32.mrb[0].mxu0
    %2206 = vdwg.mxu0
    %vm2207 = vcmask 15360
    %2208 = vst.msk [vmem:[%s7] sm:$0xff] %vm2207, %v2145
    %2209 = vst.msk [vmem:[%s7 + $0x8] sm:$0xff] %vm2207, %v2148
    %2210 = vst.msk [vmem:[%s7 + $0x10] sm:$0xff] %vm2207, %v2153
    %2211 = vst.msk [vmem:[%s7 + $0x18] sm:$0xff] %vm2207, %v2156
    %2212 = vst.msk [vmem:[%s7 + $0x20] sm:$0xff] %vm2207, %v2161
    %2213 = vst.msk [vmem:[%s7 + $0x28] sm:$0xff] %vm2207, %v2164
    %2214 = vst.msk [vmem:[%s7 + $0x30] sm:$0xff] %vm2207, %v2169
    %2215 = vst.msk [vmem:[%s7 + $0x38] sm:$0xff] %vm2207, %v2172
    %2216 = vst.msk [vmem:[%s7 + $0x40] sm:$0xff] %vm2207, %v2177
    %2217 = vst.msk [vmem:[%s7 + $0x48] sm:$0xff] %vm2207, %v2180
    %2218 = vst.msk [vmem:[%s7 + $0x50] sm:$0xff] %vm2207, %v2185
    %2219 = vst.msk [vmem:[%s7 + $0x58] sm:$0xff] %vm2207, %v2188
    %2220 = vst.msk [vmem:[%s7 + $0x60] sm:$0xff] %vm2207, %v2193
    %2221 = vst.msk [vmem:[%s7 + $0x68] sm:$0xff] %vm2207, %v2196
    %2222 = vst.msk [vmem:[%s7 + $0x70] sm:$0xff] %vm2207, %v2201
    %2223 = vst.msk [vmem:[%s7 + $0x78] sm:$0xff] %vm2207, %v2204
    // Predicated region
    $region26: #{target_pred_forward.1} parent=1 // pred_check
      _
    $region27: #{target_pred_forward.1} parent=1 // pred_check_branch
      %2225 = sbr.rel (0) target = $region29
    $region28: #{target_pred_forward.1} parent=1 // pred_region
      %s2227 = ssub.s32 32, 32
      %2228 = vsyncadd [#allocation3], %s2227
      %s2230 = sshll.u32 [#allocation2], 4
      %s2231 = int_to_ptr.vmem [resolvable:$true] %s2230
      %2233 = dma.vmem_to_hbm [thread:$0]  %s2231, 32, %s6, [#allocation3]
    $region29: #{target_pred_forward.1} parent=1 // pred_fallthru
      _
    // Predicated region
    $region30: #{target_pred_forward.1} parent=1 // pred_check
      _
    $region31: #{target_pred_forward.1} parent=1 // pred_check_branch
      %2235 = sbr.rel (0) target = $region33
    $region32: #{target_pred_forward.1} parent=1 // pred_region
      _
    $region33: #{target_pred_forward.1} parent=1 // pred_fallthru
      _
    // Predicated region
    $region34: #{target_pred_forward.1} parent=1 // pred_check
      _
    $region35: #{target_pred_forward.1} parent=1 // pred_check_branch
      %2237 = sbr.rel (0) target = $region37
    $region36: #{target_pred_forward.1} parent=1 // pred_region
      %2238 = dma.done [#allocation3], 32
    $region37: #{target_pred_forward.1} parent=1 // pred_fallthru
      _
    // Predicated region
    $region38: #{target_pred_forward.1} parent=1 // pred_check
      _
    $region39: #{target_pred_forward.1} parent=1 // pred_check_branch
      %2240 = sbr.rel (0) target = $region41
    $region40: #{target_pred_forward.1} parent=1 // pred_region
      _
    $region41: #{target_pred_forward.1} parent=1 // pred_fallthru
      _
    %2241 = vsyncpa [#allocation3], 1

</llo_original>
